<compile_context>
chip_gen: v7x
topology: tpu7x:2x2x1
jax: 0.10.0
libtpu: 0.0.40
codegen_flags: <defaults>
</compile_context>

<pallas_src>
import numpy as np
import jax
import jax.numpy as jnp
from jax import lax
from jax.experimental import pallas as pl
from jax.experimental.pallas import tpu as pltpu

LANE = 128  # output channels are padded to 128 lanes (lane-dense, unmasked vst)

# Small compat shim: modern jax exposes pltpu.CompilerParams.
_CompilerParams = getattr(pltpu, "CompilerParams", None) or getattr(
    pltpu, "TPUCompilerParams")


def _round_up(x, m):
    return (x + m - 1) // m * m


# ---------------------------------------------------------------------------
# Pallas kernel: K-packed conv GEMM + fused bias + fused BN statistics
# ---------------------------------------------------------------------------
def _kconv_kernel(x_ref, w_ref, o_ref, *stat_refs):
    """One (batch element, row slab) per grid step.

    x_ref : (1, Mt, Kp)  bf16  K-packed im2col row slab (zero padded)
    w_ref : (Kp, Cop)    bf16  K-packed weights (bias folded in as a K row)
    o_ref : (1, Mt, Cop) bf16  conv output slab (written once)
    stat_refs (only when BN stats are needed):
        s_ref, q_ref : (1, 1, Cop) f32  per-batch-element sum / sum-of-squares,
        accumulated across the row-slab grid axis (pl.when init/add).
    """
    acc = jnp.dot(x_ref[0], w_ref[...], preferred_element_type=jnp.float32)
    o_ref[0] = acc.astype(o_ref.dtype)

    if stat_refs:                                  # compile-time flag
        s_ref, q_ref = stat_refs
        s_part = jnp.sum(acc, axis=0, keepdims=True)         # (1, Cop)
        q_part = jnp.sum(acc * acc, axis=0, keepdims=True)   # (1, Cop)

        @pl.when(pl.program_id(1) == 0)
        def _init():
            s_ref[0] = s_part
            q_ref[0] = q_part

        @pl.when(pl.program_id(1) != 0)
        def _accum():
            s_ref[0] = s_ref[0] + s_part
            q_ref[0] = q_ref[0] + q_part


def kpacked_conv(col, w_packed, *, with_stats, row_tile):
    """col: (N, Mp, Kp) bf16, w_packed: (Kp, Cop) bf16 ->
         y: (N, Mp, Cop) bf16  [, ssum: (N,1,Cop) f32, ssq: (N,1,Cop) f32]."""
    N, Mp, Kp = col.shape
    Cop = w_packed.shape[1]
    Mt = row_tile
    assert Mp % Mt == 0 and Mt % 8 == 0 and Kp % 128 == 0 and Cop % 128 == 0

    y_spec = pl.BlockSpec((1, Mt, Cop), lambda n, m: (n, m, 0))
    stat_spec = pl.BlockSpec((1, 1, Cop), lambda n, m: (n, 0, 0))

    if with_stats:
        out_shape = (jax.ShapeDtypeStruct((N, Mp, Cop), jnp.bfloat16),
                     jax.ShapeDtypeStruct((N, 1, Cop), jnp.float32),
                     jax.ShapeDtypeStruct((N, 1, Cop), jnp.float32))
        out_specs = (y_spec, stat_spec, stat_spec)
        dim_sem = ("parallel", "arbitrary")   # stats accumulate along m
    else:
        out_shape = jax.ShapeDtypeStruct((N, Mp, Cop), jnp.bfloat16)
        out_specs = y_spec
        dim_sem = ("parallel", "parallel")

    # Double-buffered footprint (weights are constant-indexed but counted x2),
    # generation-aware cap, never below the estimate.
    est = (2 * Mt * Kp * 2 + 2 * Kp * Cop * 2 + 2 * Mt * Cop * 2
           + 8 * Cop * 4 + (2 << 20))
    try:
        cap = pltpu.get_tpu_info().vmem_capacity_bytes
    except Exception:
        cap = 64 << 20
    vmem_limit = int(max(est, min(max(2 * est, 16 << 20), int(0.6 * cap))))

    return pl.pallas_call(
        _kconv_kernel,
        out_shape=out_shape,
        grid=(N, Mp // Mt),
        in_specs=[
            pl.BlockSpec((1, Mt, Kp), lambda n, m: (n, m, 0)),   # im2col slab
            pl.BlockSpec((Kp, Cop), lambda n, m: (0, 0)),        # weights (constant)
        ],
        out_specs=out_specs,
        compiler_params=_CompilerParams(
            dimension_semantics=dim_sem,
            vmem_limit_bytes=vmem_limit),
    )(col, w_packed)


# ---------------------------------------------------------------------------
# Layout / packing glue (plain JAX; fuses with the unavoidable im2col gather)
# ---------------------------------------------------------------------------
def _im2col_3x3x3(x):
    """x: (N, D, H, W, C) -> (N, D*H*W, 27*C), K index = tap*C + c,
    tap = (kd*3 + kh)*3 + kw (stride-1, pad-1 patches)."""
    N, D, H, W, C = x.shape
    xp = jnp.pad(x, ((0, 0), (1, 1), (1, 1), (1, 1), (0, 0)))
    taps = [xp[:, ad:ad + D, ah:ah + H, aw:aw + W, :]
            for ad in range(3) for ah in range(3) for aw in range(3)]
    col = jnp.concatenate(taps, axis=-1)
    return col.reshape(N, D * H * W, 27 * C)


def _pack_operand(col, row_tile, with_ones=False):
    """Append the bias 'ones' column (optional), zero-pad K to a multiple of
    128 and rows to a multiple of the row tile, cast to bf16."""
    N, M, K = col.shape
    if with_ones:
        col = jnp.concatenate([col, jnp.ones((N, M, 1), col.dtype)], axis=-1)
        K += 1
    Kp = _round_up(K, 128)
    Mt = min(row_tile, _round_up(M, 8))
    Mp = _round_up(M, Mt)
    col = jnp.pad(col, ((0, 0), (0, Mp - M), (0, Kp - K)))
    return col.astype(jnp.bfloat16), Mt


def _pack_conv3_weight(w, Kp, Cop):
    """Conv3d weight (Co, Ci, 3, 3, 3) -> (Kp, Cop) bf16, K = tap*Ci + ci."""
    Co, Ci = w.shape[:2]
    wk = jnp.transpose(w.astype(jnp.float32), (2, 3, 4, 1, 0)).reshape(27 * Ci, Co)
    out = jnp.zeros((Kp, Cop), jnp.float32).at[:27 * Ci, :Co].set(wk)
    return out.astype(jnp.bfloat16)


def _pack_upsample_weight(wt, bt, Kp, Cop):
    """ConvTranspose3d(k=4, s=2, p=1) weight (Ci, Co, 4, 4, 4) + bias (Co,) ->
    (Kp, Cop) bf16 weights of the exactly-equivalent 3x3x3 stride-1 conv that
    produces 8*Co parity channels (lane = ((pd*2+ph)*2+pw)*Co + co).  The bias
    occupies the K row right after the 27*Ci taps (paired with the 'ones'
    column of the im2col operand), so it rides the same GEMM."""
    Ci, Co = wt.shape[:2]
    assert 8 * Co <= Cop, "parity-packed up-sample needs 8*cin <= 128"
    # out[2j+p] = sum_a x[j-1+a] * W[kd = 3 - 2a + p]  (invalid kd masked).
    k = 3 - 2 * np.arange(3)[:, None] + np.arange(2)[None, :]       # k[a, p]
    valid = (k >= 0) & (k <= 3)
    kc = np.clip(k, 0, 3)
    KD = kc[:, :, None, None, None, None]
    KH = kc[None, None, :, :, None, None]
    KW = kc[None, None, None, None, :, :]
    V = (valid[:, :, None, None, None, None]
         & valid[None, None, :, :, None, None]
         & valid[None, None, None, None, :, :])
    sel = wt.astype(jnp.float32)[:, :, KD, KH, KW]       # (Ci,Co,ad,pd,ah,ph,aw,pw)
    sel = sel * jnp.asarray(V, jnp.float32)[None, None]
    sel = jnp.transpose(sel, (2, 4, 6, 0, 3, 5, 7, 1))   # (ad,ah,aw,Ci,pd,ph,pw,Co)
    sel = sel.reshape(27 * Ci, 8 * Co)
    out = jnp.zeros((Kp, Cop), jnp.float32)
    out = out.at[:27 * Ci, :8 * Co].set(sel)
    out = out.at[27 * Ci, :8 * Co].set(jnp.tile(bt.astype(jnp.float32), 8))
    return out.astype(jnp.bfloat16)


def _bn_scale_shift(ssum, ssq, gamma, beta, count, eps=1e-5):
    """Per-batch-element partial sums -> per-channel BN scale/shift."""
    c = gamma.shape[0]
    s = jnp.sum(ssum, axis=0).reshape(-1)[:c]
    q = jnp.sum(ssq, axis=0).reshape(-1)[:c]
    mean = s / count
    var = jnp.maximum(q / count - mean * mean, 0.0)       # guard cancellation
    scale = gamma.astype(jnp.float32) * lax.rsqrt(var + eps)
    shift = beta.astype(jnp.float32) - mean * scale
    return scale, shift


# ---------------------------------------------------------------------------
# UNetBlock forward (Pallas path)
# ---------------------------------------------------------------------------
def unet_block_forward(x, params, *, row_tile=256):
    """x: (N, cin, D, H, W) f32 -> (N, cout, 2D, 2H, 2W) f32 (training-mode BN)."""
    N, Ci, D, H, W = x.shape
    Co = params["w2"].shape[0]
    COP = LANE
    assert 8 * Ci <= COP and Co <= COP

    xc = jnp.transpose(x, (0, 2, 3, 4, 1)).astype(jnp.float32)       # NDHWC

    # ---- stage 0: ConvTranspose3d(cin, cin, 4, 2, 1, bias=True) ----
    col0, mt0 = _pack_operand(_im2col_3x3x3(xc), row_tile, with_ones=True)
    w0 = _pack_upsample_weight(params["wt"], params["bt"], col0.shape[-1], COP)
    y0 = kpacked_conv(col0, w0, with_stats=False, row_tile=mt0)
    M0 = D * H * W
    up = y0[:, :M0, :8 * Ci].reshape(N, D, H, W, 2, 2, 2, Ci)
    up = jnp.transpose(up, (0, 1, 4, 2, 5, 3, 6, 7)).reshape(
        N, 2 * D, 2 * H, 2 * W, Ci)                      # pixel shuffle (bf16)

    Do, Ho, Wo = 2 * D, 2 * H, 2 * W
    M1 = Do * Ho * Wo
    count = N * M1

    # ---- stage 1: Conv3d(cin, cin, 3, pad 1, no bias) + BN + ReLU6 ----
    col1, mt1 = _pack_operand(_im2col_3x3x3(up), row_tile)
    w1 = _pack_conv3_weight(params["w1"], col1.shape[-1], COP)
    y1, s1, q1 = kpacked_conv(col1, w1, with_stats=True, row_tile=mt1)
    sc1, sh1 = _bn_scale_shift(s1, q1, params["g1"], params["b1"], count)
    # BN apply + ReLU6 on the compact activation, fused with the next im2col.
    a1 = jnp.clip(y1[:, :M1, :Ci].astype(jnp.float32) * sc1 + sh1, 0.0, 6.0)
    a1 = a1.reshape(N, Do, Ho, Wo, Ci).astype(jnp.bfloat16)

    # ---- stage 2: Conv3d(cin, cout, 3, pad 1, no bias) + BN ----
    col2, mt2 = _pack_operand(_im2col_3x3x3(a1), row_tile)
    w2 = _pack_conv3_weight(params["w2"], col2.shape[-1], COP)
    y2, s2, q2 = kpacked_conv(col2, w2, with_stats=True, row_tile=mt2)
    sc2, sh2 = _bn_scale_shift(s2, q2, params["g2"], params["b2"], count)
    out = y2[:, :M1, :Co].astype(jnp.float32) * sc2 + sh2
    out = out.reshape(N, Do, Ho, Wo, Co)
    return jnp.transpose(out, (0, 4, 1, 2, 3))                        # NCDHW


# ---------------------------------------------------------------------------
# Pure-JAX reference (lax convs, f32 HIGHEST) for correctness check
# ---------------------------------------------------------------------------
def reference_forward(x, params, eps=1e-5):
    dn = ("NCDHW", "OIDHW", "NCDHW")
    w_eq = jnp.transpose(jnp.flip(params["wt"], axis=(2, 3, 4)), (1, 0, 2, 3, 4))
    y = lax.conv_general_dilated(
        x.astype(jnp.float32), w_eq, window_strides=(1, 1, 1),
        padding=[(2, 2)] * 3, lhs_dilation=(2, 2, 2), dimension_numbers=dn,
        precision=lax.Precision.HIGHEST)
    y = y + params["bt"][None, :, None, None, None]

    def conv3(z, w):
        return lax.conv_general_dilated(z, w, (1, 1, 1), [(1, 1)] * 3,
                                        dimension_numbers=dn,
                                        precision=lax.Precision.HIGHEST)

    def bn(z, g, b):
        mean = z.mean(axis=(0, 2, 3, 4), keepdims=True)
        var = z.var(axis=(0, 2, 3, 4), keepdims=True)
        return ((z - mean) * lax.rsqrt(var + eps) * g[None, :, None, None, None]
                + b[None, :, None, None, None])

    y = jnp.clip(bn(conv3(y, params["w1"]), params["g1"], params["b1"]), 0.0, 6.0)
    y = bn(conv3(y, params["w2"]), params["g2"], params["b2"])
    return y


# ---------------------------------------------------------------------------
if __name__ == "__main__":
    cin, cout = 4, 8
    N, D, H, W = 2, 8, 8, 8

    ks = jax.random.split(jax.random.PRNGKey(0), 9)
    params = {
        # ConvTranspose3d weight (in, out, kD, kH, kW) — PyTorch convention
        "wt": 0.1 * jax.random.normal(ks[0], (cin, cin, 4, 4, 4), jnp.float32),
        "bt": 0.1 * jax.random.normal(ks[1], (cin,), jnp.float32),
        # Conv3d weights (out, in, kD, kH, kW)
        "w1": 0.1 * jax.random.normal(ks[2], (cin, cin, 3, 3, 3), jnp.float32),
        "g1": 1.0 + 0.1 * jax.random.normal(ks[3], (cin,), jnp.float32),
        "b1": 0.1 * jax.random.normal(ks[4], (cin,), jnp.float32),
        "w2": 0.1 * jax.random.normal(ks[5], (cout, cin, 3, 3, 3), jnp.float32),
        "g2": 1.0 + 0.1 * jax.random.normal(ks[6], (cout,), jnp.float32),
        "b2": 0.1 * jax.random.normal(ks[7], (cout,), jnp.float32),
    }
    x = jax.random.normal(ks[8], (N, cin, D, H, W), jnp.float32)

    fwd = jax.jit(unet_block_forward)
    out = jax.block_until_ready(fwd(x, params))
    assert out.shape == (N, cout, 2 * D, 2 * H, 2 * W), out.shape

    ref = jax.block_until_ready(reference_forward(x, params))
    # bf16 MXU operands + bf16 inter-stage activations, f32 accumulation.
    np.testing.assert_allclose(np.asarray(out), np.asarray(ref),
                               rtol=3e-2, atol=3e-2)

    print("KERNEL_OK")
</pallas_src>

<mosaic_0001>
module attributes {stable_mosaic.version = 11 : i64} {
  func.func @_kconv_kernel(%arg0: i32, %arg1: i32, %arg2: memref<1x256x128xbf16, #tpu.memory_space<vmem>>, %arg3: memref<128x128xbf16, #tpu.memory_space<vmem>>, %arg4: memref<1x256x128xbf16, #tpu.memory_space<vmem>>) attributes {dimension_semantics = [#tpu.dimension_semantics<parallel>, #tpu.dimension_semantics<parallel>], iteration_bounds = array<i64: 2, 2>, scalar_prefetch = 0 : i64, scratch_operands = 0 : i64, tpu.core_type = #tpu.core_type<tc>, window_params = [{transform_indices = @transform_0, window_bounds = array<i64: 1, 256, 128>}, {pipeline_mode = #tpu.pipeline_mode<synchronous>, transform_indices = @transform_1, window_bounds = array<i64: 128, 128>}, {transform_indices = @transform_2, window_bounds = array<i64: 1, 256, 128>}]} {
    %c0 = arith.constant 0 : index
    %c0_0 = arith.constant 0 : index
    %c0_1 = arith.constant 0 : index
    %0 = vector.load %arg2[%c0, %c0_0, %c0_1] : memref<1x256x128xbf16, #tpu.memory_space<vmem>>, vector<1x256x128xbf16>
    %1 = vector.shape_cast %0 : vector<1x256x128xbf16> to vector<256x128xbf16>
    %c0_2 = arith.constant 0 : index
    %c0_3 = arith.constant 0 : index
    %2 = vector.load %arg3[%c0_2, %c0_3] : memref<128x128xbf16, #tpu.memory_space<vmem>>, vector<128x128xbf16>
    %cst = arith.constant dense<0.000000e+00> : vector<256x128xf32>
    %3 = tpu.matmul %1, %2, %cst {dimension_numbers = #tpu.dot_dimension_numbers<[1], [0], [0], [1], [0, 0, 1, 1], [], []>} : vector<256x128xbf16>, vector<128x128xbf16>, vector<256x128xf32> -> vector<256x128xf32>
    %4 = arith.truncf %3 : vector<256x128xf32> to vector<256x128xbf16>
    %c0_4 = arith.constant 0 : index
    %c0_5 = arith.constant 0 : index
    %c0_6 = arith.constant 0 : index
    %5 = vector.load %arg4[%c0_4, %c0_5, %c0_6] : memref<1x256x128xbf16, #tpu.memory_space<vmem>>, vector<1x256x128xbf16>
    %6 = vector.shape_cast %5 : vector<1x256x128xbf16> to vector<256x128xbf16>
    %7 = vector.shape_cast %4 : vector<256x128xbf16> to vector<1x256x128xbf16>
    tpu.vector_store %arg4[%c0_4, %c0_5, %c0_6], %7 {strides = array<i32>} : memref<1x256x128xbf16, #tpu.memory_space<vmem>>, vector<1x256x128xbf16>,
    return
  }
  func.func @transform_0(%arg0: i32, %arg1: i32) -> (i32, i32, i32) {
    %c0_i32 = arith.constant 0 : i32
    %c0_i32_0 = arith.constant 0 : i32
    return %arg0, %arg1, %c0_i32 : i32, i32, i32
  }
  func.func @transform_1(%arg0: i32, %arg1: i32) -> (i32, i32) {
    %c0_i32 = arith.constant 0 : i32
    %c0_i32_0 = arith.constant 0 : i32
    %c0_i32_1 = arith.constant 0 : i32
    return %c0_i32, %c0_i32_0 : i32, i32
  }
  func.func @transform_2(%arg0: i32, %arg1: i32) -> (i32, i32, i32) {
    %c0_i32 = arith.constant 0 : i32
    %c0_i32_0 = arith.constant 0 : i32
    return %arg0, %arg1, %c0_i32 : i32, i32, i32
  }
}

module attributes {stable_mosaic.version = 11 : i64} {
  func.func @_kconv_kernel(%arg0: i32, %arg1: i32, %arg2: memref<1x256x128xbf16, #tpu.memory_space<vmem>>, %arg3: memref<128x128xbf16, #tpu.memory_space<vmem>>, %arg4: memref<1x256x128xbf16, #tpu.memory_space<vmem>>, %arg5: memref<1x1x128xf32, #tpu.memory_space<vmem>>, %arg6: memref<1x1x128xf32, #tpu.memory_space<vmem>>) attributes {dimension_semantics = [#tpu.dimension_semantics<parallel>, #tpu.dimension_semantics<arbitrary>], iteration_bounds = array<i64: 2, 16>, scalar_prefetch = 0 : i64, scratch_operands = 0 : i64, tpu.core_type = #tpu.core_type<tc>, window_params = [{transform_indices = @transform_0, window_bounds = array<i64: 1, 256, 128>}, {pipeline_mode = #tpu.pipeline_mode<synchronous>, transform_indices = @transform_1, window_bounds = array<i64: 128, 128>}, {transform_indices = @transform_2, window_bounds = array<i64: 1, 256, 128>}, {transform_indices = @transform_3, window_bounds = array<i64: 1, 1, 128>}, {transform_indices = @transform_4, window_bounds = array<i64: 1, 1, 128>}]} {
    %c0 = arith.constant 0 : index
    %c0_0 = arith.constant 0 : index
    %c0_1 = arith.constant 0 : index
    %0 = vector.load %arg2[%c0, %c0_0, %c0_1] : memref<1x256x128xbf16, #tpu.memory_space<vmem>>, vector<1x256x128xbf16>
    %1 = vector.shape_cast %0 : vector<1x256x128xbf16> to vector<256x128xbf16>
    %c0_2 = arith.constant 0 : index
    %c0_3 = arith.constant 0 : index
    %2 = vector.load %arg3[%c0_2, %c0_3] : memref<128x128xbf16, #tpu.memory_space<vmem>>, vector<128x128xbf16>
    %cst = arith.constant dense<0.000000e+00> : vector<256x128xf32>
    %3 = tpu.matmul %1, %2, %cst {dimension_numbers = #tpu.dot_dimension_numbers<[1], [0], [0], [1], [0, 0, 1, 1], [], []>} : vector<256x128xbf16>, vector<128x128xbf16>, vector<256x128xf32> -> vector<256x128xf32>
    %4 = arith.truncf %3 : vector<256x128xf32> to vector<256x128xbf16>
    %c0_4 = arith.constant 0 : index
    %c0_5 = arith.constant 0 : index
    %c0_6 = arith.constant 0 : index
    %5 = vector.load %arg4[%c0_4, %c0_5, %c0_6] : memref<1x256x128xbf16, #tpu.memory_space<vmem>>, vector<1x256x128xbf16>
    %6 = vector.shape_cast %5 : vector<1x256x128xbf16> to vector<256x128xbf16>
    %7 = vector.shape_cast %4 : vector<256x128xbf16> to vector<1x256x128xbf16>
    tpu.vector_store %arg4[%c0_4, %c0_5, %c0_6], %7 {strides = array<i32>} : memref<1x256x128xbf16, #tpu.memory_space<vmem>>, vector<1x256x128xbf16>,
    %cst_7 = arith.constant dense<0.000000e+00> : vector<128xf32>
    %8 = vector.multi_reduction <add>, %3, %cst_7 [0] : vector<256x128xf32> to vector<128xf32>
    %9 = vector.shape_cast %8 : vector<128xf32> to vector<1x128xf32>
    %10 = arith.mulf %3, %3 : vector<256x128xf32>
    %cst_8 = arith.constant dense<0.000000e+00> : vector<128xf32>
    %11 = vector.multi_reduction <add>, %10, %cst_8 [0] : vector<256x128xf32> to vector<128xf32>
    %12 = vector.shape_cast %11 : vector<128xf32> to vector<1x128xf32>
    %c0_i32 = arith.constant 0 : i32
    %13 = arith.cmpi eq, %arg1, %c0_i32 : i32
    %14 = arith.extui %13 : i1 to i32
    %c0_i32_9 = arith.constant 0 : i32
    %15 = arith.cmpi ne, %14, %c0_i32_9 : i32
    scf.if %15 {
      %c0_12 = arith.constant 0 : index
      %c0_13 = arith.constant 0 : index
      %c0_14 = arith.constant 0 : index
      %19 = vector.load %arg5[%c0_12, %c0_13, %c0_14] : memref<1x1x128xf32, #tpu.memory_space<vmem>>, vector<1x1x128xf32>
      %20 = vector.shape_cast %19 : vector<1x1x128xf32> to vector<1x128xf32>
      %21 = vector.shape_cast %9 : vector<1x128xf32> to vector<1x1x128xf32>
      tpu.vector_store %arg5[%c0_12, %c0_13, %c0_14], %21 {strides = array<i32>} : memref<1x1x128xf32, #tpu.memory_space<vmem>>, vector<1x1x128xf32>,
      %c0_15 = arith.constant 0 : index
      %c0_16 = arith.constant 0 : index
      %c0_17 = arith.constant 0 : index
      %22 = vector.load %arg6[%c0_15, %c0_16, %c0_17] : memref<1x1x128xf32, #tpu.memory_space<vmem>>, vector<1x1x128xf32>
      %23 = vector.shape_cast %22 : vector<1x1x128xf32> to vector<1x128xf32>
      %24 = vector.shape_cast %12 : vector<1x128xf32> to vector<1x1x128xf32>
      tpu.vector_store %arg6[%c0_15, %c0_16, %c0_17], %24 {strides = array<i32>} : memref<1x1x128xf32, #tpu.memory_space<vmem>>, vector<1x1x128xf32>,
    } else {
    }
    %c0_i32_10 = arith.constant 0 : i32
    %16 = arith.cmpi ne, %arg1, %c0_i32_10 : i32
    %17 = arith.extui %16 : i1 to i32
    %c0_i32_11 = arith.constant 0 : i32
    %18 = arith.cmpi ne, %17, %c0_i32_11 : i32
    scf.if %18 {
      %c0_12 = arith.constant 0 : index
      %c0_13 = arith.constant 0 : index
      %c0_14 = arith.constant 0 : index
      %19 = vector.load %arg5[%c0_12, %c0_13, %c0_14] : memref<1x1x128xf32, #tpu.memory_space<vmem>>, vector<1x1x128xf32>
      %20 = vector.shape_cast %19 : vector<1x1x128xf32> to vector<1x128xf32>
      %21 = arith.addf %20, %9 : vector<1x128xf32>
      %c0_15 = arith.constant 0 : index
      %c0_16 = arith.constant 0 : index
      %c0_17 = arith.constant 0 : index
      %22 = vector.load %arg5[%c0_15, %c0_16, %c0_17] : memref<1x1x128xf32, #tpu.memory_space<vmem>>, vector<1x1x128xf32>
      %23 = vector.shape_cast %22 : vector<1x1x128xf32> to vector<1x128xf32>
      %24 = vector.shape_cast %21 : vector<1x128xf32> to vector<1x1x128xf32>
      tpu.vector_store %arg5[%c0_15, %c0_16, %c0_17], %24 {strides = array<i32>} : memref<1x1x128xf32, #tpu.memory_space<vmem>>, vector<1x1x128xf32>,
      %c0_18 = arith.constant 0 : index
      %c0_19 = arith.constant 0 : index
      %c0_20 = arith.constant 0 : index
      %25 = vector.load %arg6[%c0_18, %c0_19, %c0_20] : memref<1x1x128xf32, #tpu.memory_space<vmem>>, vector<1x1x128xf32>
      %26 = vector.shape_cast %25 : vector<1x1x128xf32> to vector<1x128xf32>
      %27 = arith.addf %26, %12 : vector<1x128xf32>
      %c0_21 = arith.constant 0 : index
      %c0_22 = arith.constant 0 : index
      %c0_23 = arith.constant 0 : index
      %28 = vector.load %arg6[%c0_21, %c0_22, %c0_23] : memref<1x1x128xf32, #tpu.memory_space<vmem>>, vector<1x1x128xf32>
      %29 = vector.shape_cast %28 : vector<1x1x128xf32> to vector<1x128xf32>
      %30 = vector.shape_cast %27 : vector<1x128xf32> to vector<1x1x128xf32>
      tpu.vector_store %arg6[%c0_21, %c0_22, %c0_23], %30 {strides = array<i32>} : memref<1x1x128xf32, #tpu.memory_space<vmem>>, vector<1x1x128xf32>,
    } else {
    }
    return
  }
  func.func @transform_0(%arg0: i32, %arg1: i32) -> (i32, i32, i32) {
    %c0_i32 = arith.constant 0 : i32
    %c0_i32_0 = arith.constant 0 : i32
    return %arg0, %arg1, %c0_i32 : i32, i32, i32
  }
  func.func @transform_1(%arg0: i32, %arg1: i32) -> (i32, i32) {
    %c0_i32 = arith.constant 0 : i32
    %c0_i32_0 = arith.constant 0 : i32
    %c0_i32_1 = arith.constant 0 : i32
    return %c0_i32, %c0_i32_0 : i32, i32
  }
  func.func @transform_2(%arg0: i32, %arg1: i32) -> (i32, i32, i32) {
    %c0_i32 = arith.constant 0 : i32
    %c0_i32_0 = arith.constant 0 : i32
    return %arg0, %arg1, %c0_i32 : i32, i32, i32
  }
  func.func @transform_3(%arg0: i32, %arg1: i32) -> (i32, i32, i32) {
    %c0_i32 = arith.constant 0 : i32
    %c0_i32_0 = arith.constant 0 : i32
    %c0_i32_1 = arith.constant 0 : i32
    return %arg0, %c0_i32, %c0_i32_0 : i32, i32, i32
  }
  func.func @transform_4(%arg0: i32, %arg1: i32) -> (i32, i32, i32) {
    %c0_i32 = arith.constant 0 : i32
    %c0_i32_0 = arith.constant 0 : i32
    %c0_i32_1 = arith.constant 0 : i32
    return %arg0, %c0_i32, %c0_i32_0 : i32, i32, i32
  }
}

</mosaic_0001>

<llo_original>
// kernel: tile.8
$region0: #{tile.8}
  #allocation0 [shape = 's32[1]{0}', space=sflag, size = 0x4, scoped, tag = 'scoped memory for tile.8']
  %s0 = inlined_call_operand.vmem [shape: f32[4], index: 0, kind: input, shape index: {}]
  %s1 = inlined_call_operand.vmem [shape: bf16[8,4], index: 1, kind: output, shape index: {}]
  // Predicated region
  $region2: #{tile.8} parent=0 // pred_check
    _
  $region3: #{tile.8} parent=0 // pred_check_branch
    %3 = sbr.rel (0) target = $region5
  $region4: #{tile.8} parent=0 // pred_region
    _
  $region5: #{tile.8} parent=0 // pred_fallthru
    _
  %v4 = vld [vmem:[%s0] ss:$0 sm:$0xff]
  %v5 = vpack.c.bf16 0.0, %v4
  %6 = vst [vmem:[%s1] sm:$0xf] %v5

// kernel: unet_block_forward.3
$region0: #{unet_block_forward.3}
  #allocation0 [shape = 'u32[]', space=smem, size = 0x4, offset = 0x4, fixed_abs, tag = 'smem constant byte address 0x4 - core index']
  #allocation1 [shape = 'u32[144,128]{1,0:T(1,128)}', space=vmem, size = 0x12000, scoped, tag = 'internal scratch']
  %s0 = inlined_call_operand.vmem [shape: bf16[2,512,128], index: 0, kind: input, shape index: {}]
  %s1 = inlined_call_operand.vmem [shape: bf16[128,128], index: 1, kind: input, shape index: {}]
  %s2 = inlined_call_operand.vmem [shape: bf16[2,512,128], index: 2, kind: output, shape index: {}]
  %s3 = sld [smem:[#allocation0]]
  $region41: #{unet_block_forward.3} parent=0
    _
  %s5 = ssub.s32 1, %s3
  %s6 = scalar_select 0, %s5, %s3
  loop: start=0, step=1, limit=6
  $region2: #{unet_block_forward.3} parent=0 // loop_pre_header
    _
  $region3: #{unet_block_forward.3} parent=0 // loop_header
    %s8 = sphi 0, %s12
    %p9 = scmp.ge.s32.totalorder %s8, 6
    %s15 = sphi 0, %s27
    %s16 = sphi 0, %s23
    %s17 = sphi 0, %s15
    %s18 = sphi 0, %s16
    %s19 = sphi 0, %s17
    %s20 = sphi 0, %s18
    %s32 = sphi 0, %s34
    %s35 = sphi 0, %s32
    %s36 = sphi 0, %s35
    %s52 = sphi 0, %s36
    %s56 = sphi 0, %s56
    %s58 = sphi 0, %s56
    %s59 = sphi 0, %s58
    %s73 = sphi 0, %s59
    %s81 = sphi 0, %s83
    %s84 = sphi 0, %s81
    %s85 = sphi 0, %s84
    %s101 = sphi 0, %s85
  $region4: #{unet_block_forward.3} parent=0 // loop_header_branch
    %11 = sbr.rel (%p9) target = $region8
  $region5: #{unet_block_forward.3} parent=0 // loop_body
    %s13 = ssub.s32 %s8, 1
    %s14 = ssub.s32 %s8, 2
    %s21 = sadd.s32 1, %s16
    %p22 = scmp.ge.s32.totalorder %s21, 2
    %s23 = scalar_select %p22, 0, %s21
    %s24 = sadd.s32 1, %s15
    %s25 = scalar_select %p22, %s24, %s15
    %p26 = scmp.ge.s32.totalorder %s25, 2
    %s27 = scalar_select %p26, 0, %s25
    %s28 = ssub.s32 %s15, %s27
    %s29 = ssub.s32 %s16, %s23
    %s30 = sor.u32 %s28, %s29
    %p31 = scmp.eq.s32.totalorder %s30, 0
    %s33 = sadd.s32 %s32, 1
    %s34 = scalar_select %p31, %s32, %s33
    %p37 = pneg %p31
    %p38 = scmp.eq.s32.totalorder %s8, 3
    %p39 = por %p37, %p38
    %p40 = scmp.ne.s32.totalorder %s32, %s35
    %p41 = scmp.eq.s32.totalorder %s8, 0
    %p42 = por %p40, %p41
    %p43 = scmp.ne.s32.totalorder %s32, %s35
    %p44 = scmp.eq.s32.totalorder %s13, 3
    %p45 = por %p43, %p44
    %p46 = scmp.ne.s32.totalorder %s35, %s36
    %p47 = scmp.eq.s32.totalorder %s13, 0
    %p48 = por %p46, %p47
    %p49 = scmp.ne.s32.totalorder %s35, %s36
    %p50 = scmp.eq.s32.totalorder %s14, 3
    %p51 = por %p49, %p50
    %p53 = scmp.ne.s32.totalorder %s36, %s52
    %p54 = scmp.eq.s32.totalorder %s14, 0
    %p55 = por %p53, %p54
    %s57 = sadd.s32 %s56, 1
    %p60 = scmp.eq.s32.totalorder %s8, 3
    %p61 = scmp.ne.s32.totalorder %s56, %s58
    %p62 = scmp.eq.s32.totalorder %s8, 0
    %p63 = por %p61, %p62
    %p64 = scmp.ne.s32.totalorder %s56, %s58
    %p65 = scmp.eq.s32.totalorder %s13, 3
    %p66 = por %p64, %p65
    %p67 = scmp.ne.s32.totalorder %s58, %s59
    %p68 = scmp.eq.s32.totalorder %s13, 0
    %p69 = por %p67, %p68
    %p70 = scmp.ne.s32.totalorder %s58, %s59
    %p71 = scmp.eq.s32.totalorder %s14, 3
    %p72 = por %p70, %p71
    %p74 = scmp.ne.s32.totalorder %s59, %s73
    %p75 = scmp.eq.s32.totalorder %s14, 0
    %p76 = por %p74, %p75
    %s77 = ssub.s32 %s15, %s27
    %s78 = ssub.s32 %s16, %s23
    %s79 = sor.u32 %s77, %s78
    %p80 = scmp.eq.s32.totalorder %s79, 0
    %s82 = sadd.s32 %s81, 1
    %s83 = scalar_select %p80, %s81, %s82
    %p86 = pneg %p80
    %p87 = scmp.eq.s32.totalorder %s8, 3
    %p88 = por %p86, %p87
    %p89 = scmp.ne.s32.totalorder %s81, %s84
    %p90 = scmp.eq.s32.totalorder %s8, 0
    %p91 = por %p89, %p90
    %p92 = scmp.ne.s32.totalorder %s81, %s84
    %p93 = scmp.eq.s32.totalorder %s13, 3
    %p94 = por %p92, %p93
    %p95 = scmp.ne.s32.totalorder %s84, %s85
    %p96 = scmp.eq.s32.totalorder %s13, 0
    %p97 = por %p95, %p96
    %p98 = scmp.ne.s32.totalorder %s84, %s85
    %p99 = scmp.eq.s32.totalorder %s14, 3
    %p100 = por %p98, %p99
    %p102 = scmp.ne.s32.totalorder %s85, %s101
    %p103 = scmp.eq.s32.totalorder %s14, 0
    %p104 = por %p102, %p103
    %p105 = scmp.le.s32.totalorder 1, %s8
    %p106 = scmp.lt.s32.totalorder %s8, 5
    %p107 = pnand %p105, %p106
    %p108 = pneg %p107
    // Predicated region
    $region9: #{unet_block_forward.3} parent=5 // pred_check
      _
    $region10: #{unet_block_forward.3} parent=5 // pred_check_branch
      %110 = sbr.rel (%p107) target = $region12
    $region11: #{unet_block_forward.3} parent=5 // pred_region
      %s111 = ssub.s32 %s8, 1
      // Predicated region
      $region13: #{unet_block_forward.3} parent=11 // pred_check
        %p112 = pneg %p69
      $region14: #{unet_block_forward.3} parent=11 // pred_check_branch
        %114 = sbr.rel (%p112) target = $region16
      $region15: #{unet_block_forward.3} parent=11 // pred_region
        _
      $region16: #{unet_block_forward.3} parent=11 // pred_fallthru
        _
    $region12: #{unet_block_forward.3} parent=5 // pred_fallthru
      _
    %p115 = scmp.lt.s32.totalorder %s8, 4
    // Predicated region
    $region17: #{unet_block_forward.3} parent=5 // pred_check
      %p116 = pneg %p115
    $region18: #{unet_block_forward.3} parent=5 // pred_check_branch
      %118 = sbr.rel (%p116) target = $region20
    $region19: #{unet_block_forward.3} parent=5 // pred_region
      // Predicated region
      $region21: #{unet_block_forward.3} parent=19 // pred_check
        %p119 = pneg %p42
      $region22: #{unet_block_forward.3} parent=19 // pred_check_branch
        %121 = sbr.rel (%p119) target = $region24
      $region23: #{unet_block_forward.3} parent=19 // pred_region
        %s122 = smul.u32 32, %s16
        %p123 = scmp.lt.s32.totalorder %s15, 1
        %s124 = scalar_select %p123, %s15, 1
        %p125 = scmp.lt.s32.totalorder %s122, 63
        %s126 = scalar_select %p125, %s122, 63
        %s127 = smul.addr %s124, 64
        %s128 = sadd.s32 %s126, %s127
        %s129 = smul.addr %s128, 4
        %s130 = scalar_lea.vmem %s0, %s129
        %s131 = smul.u32 32, %s16
      $region24: #{unet_block_forward.3} parent=19 // pred_fallthru
        _
    $region20: #{unet_block_forward.3} parent=5 // pred_fallthru
      _
    %p132 = scmp.le.s32.totalorder 1, %s8
    %p133 = scmp.lt.s32.totalorder %s8, 5
    %p134 = pnand %p132, %p133
    %p135 = pneg %p134
    // Predicated region
    $region25: #{unet_block_forward.3} parent=5 // pred_check
      _
    $region26: #{unet_block_forward.3} parent=5 // pred_check_branch
      %137 = sbr.rel (%p134) target = $region28
    $region27: #{unet_block_forward.3} parent=5 // pred_region
      %s138 = ssub.s32 %s8, 1
      %s139 = smul.u32 32, %s18
      %p140 = scmp.lt.s32.totalorder %s17, 1
      %s141 = scalar_select %p140, %s17, 1
      %p142 = scmp.lt.s32.totalorder %s139, 63
      %s143 = scalar_select %p142, %s139, 63
      %s144 = smul.addr %s141, 64
      %s145 = sadd.s32 %s143, %s144
      %s146 = smul.addr %s145, 4
      %s147 = scalar_lea.vmem %s0, %s146
      %p148 = pneg %p48
      %p149 = pneg %p45
      %p150 = pneg %p69
      %p151 = pneg %p66
      %p152 = pneg %p97
      %p153 = pneg %p94
      %s154 = smul.u32 32, %s18
      %p155 = scmp.lt.s32.totalorder %s17, 1
      %s156 = scalar_select %p155, %s17, 1
      %p157 = scmp.lt.s32.totalorder %s154, 63
      %s158 = scalar_select %p157, %s154, 63
      %s159 = smul.addr %s156, 64
      %s160 = sadd.s32 %s158, %s159
      %s161 = smul.addr %s160, 4
      %s162 = scalar_lea.vmem %s2, %s161
      %s163 = smul.u32 32, %s18
      %p164 = scmp.lt.s32.totalorder %s17, 1
      %s165 = scalar_select %p164, %s17, 1
      %p166 = scmp.lt.s32.totalorder %s163, 63
      %s167 = scalar_select %p166, %s163, 63
      %s168 = smul.addr %s165, 64
      %s169 = sadd.s32 %s167, %s168
      %s170 = smul.addr %s169, 4
      %s171 = scalar_lea.vmem %s0, %s170
      %s172 = smul.u32 32, %s18
      %s173 = smul.u32 32, %s18
      %p174 = scmp.lt.s32.totalorder %s17, 1
      %s175 = scalar_select %p174, %s17, 1
      %p176 = scmp.lt.s32.totalorder %s173, 63
      %s177 = scalar_select %p176, %s173, 63
      %s178 = smul.addr %s175, 64
      %s179 = sadd.s32 %s177, %s178
      %s180 = smul.addr %s179, 4
      %s181 = scalar_lea.vmem %s2, %s180
      %s182 = smul.u32 32, %s18
      %v184 = vld [vmem:[%s171] sm:$0xf]
      %v185 = vld [vmem:[%s171 + $0x4] sm:$0xf]
      %v186 = vld [vmem:[%s171 + $0x8] sm:$0xf]
      %v187 = vld [vmem:[%s171 + $0xc] sm:$0xf]
      %v188 = vld [vmem:[%s171 + $0x10] sm:$0xf]
      %v189 = vld [vmem:[%s171 + $0x14] sm:$0xf]
      %v190 = vld [vmem:[%s171 + $0x18] sm:$0xf]
      %v191 = vld [vmem:[%s171 + $0x1c] sm:$0xf]
      %v192 = vld [vmem:[%s171 + $0x20] sm:$0xf]
      %v193 = vld [vmem:[%s171 + $0x24] sm:$0xf]
      %v194 = vld [vmem:[%s171 + $0x28] sm:$0xf]
      %v195 = vld [vmem:[%s171 + $0x2c] sm:$0xf]
      %v196 = vld [vmem:[%s171 + $0x30] sm:$0xf]
      %v197 = vld [vmem:[%s171 + $0x34] sm:$0xf]
      %v198 = vld [vmem:[%s171 + $0x38] sm:$0xf]
      %v199 = vld [vmem:[%s171 + $0x3c] sm:$0xf]
      %v200 = vld [vmem:[%s171 + $0x40] sm:$0xf]
      %v201 = vld [vmem:[%s171 + $0x44] sm:$0xf]
      %v202 = vld [vmem:[%s171 + $0x48] sm:$0xf]
      %v203 = vld [vmem:[%s171 + $0x4c] sm:$0xf]
      %v204 = vld [vmem:[%s171 + $0x50] sm:$0xf]
      %v205 = vld [vmem:[%s171 + $0x54] sm:$0xf]
      %v206 = vld [vmem:[%s171 + $0x58] sm:$0xf]
      %v207 = vld [vmem:[%s171 + $0x5c] sm:$0xf]
      %v208 = vld [vmem:[%s171 + $0x60] sm:$0xf]
      %v209 = vld [vmem:[%s171 + $0x64] sm:$0xf]
      %v210 = vld [vmem:[%s171 + $0x68] sm:$0xf]
      %v211 = vld [vmem:[%s171 + $0x6c] sm:$0xf]
      %v212 = vld [vmem:[%s171 + $0x70] sm:$0xf]
      %v213 = vld [vmem:[%s171 + $0x74] sm:$0xf]
      %v214 = vld [vmem:[%s171 + $0x78] sm:$0xf]
      %v215 = vld [vmem:[%s171 + $0x7c] sm:$0xf]
      %v216 = vld [vmem:[%s1] sm:$0xf]
      %v217 = vld [vmem:[%s1 + $0x4] sm:$0xf]
      %v218 = vld [vmem:[%s1 + $0x8] sm:$0xf]
      %v219 = vld [vmem:[%s1 + $0xc] sm:$0xf]
      %v220 = vld [vmem:[%s1 + $0x10] sm:$0xf]
      %v221 = vld [vmem:[%s1 + $0x14] sm:$0xf]
      %v222 = vld [vmem:[%s1 + $0x18] sm:$0xf]
      %v223 = vld [vmem:[%s1 + $0x1c] sm:$0xf]
      %v224 = vld [vmem:[%s1 + $0x20] sm:$0xf]
      %v225 = vld [vmem:[%s1 + $0x24] sm:$0xf]
      %v226 = vld [vmem:[%s1 + $0x28] sm:$0xf]
      %v227 = vld [vmem:[%s1 + $0x2c] sm:$0xf]
      %v228 = vld [vmem:[%s1 + $0x30] sm:$0xf]
      %v229 = vld [vmem:[%s1 + $0x34] sm:$0xf]
      %v230 = vld [vmem:[%s1 + $0x38] sm:$0xf]
      %v231 = vld [vmem:[%s1 + $0x3c] sm:$0xf]
      %v264 = vunpack.c.l.b16 %v184
      %v265 = vunpack.c.l.b16 %v185
      %v266 = vunpack.c.l.b16 %v186
      %v267 = vunpack.c.l.b16 %v187
      %v268 = vunpack.c.l.b16 %v188
      %v269 = vunpack.c.l.b16 %v189
      %v270 = vunpack.c.l.b16 %v190
      %v271 = vunpack.c.l.b16 %v191
      %v272 = vunpack.c.l.b16 %v192
      %v273 = vunpack.c.l.b16 %v193
      %v274 = vunpack.c.l.b16 %v194
      %v275 = vunpack.c.l.b16 %v195
      %v276 = vunpack.c.l.b16 %v196
      %v277 = vunpack.c.l.b16 %v197
      %v278 = vunpack.c.l.b16 %v198
      %v279 = vunpack.c.l.b16 %v199
      %v280 = vunpack.c.l.b16 %v200
      %v281 = vunpack.c.l.b16 %v201
      %v282 = vunpack.c.l.b16 %v202
      %v283 = vunpack.c.l.b16 %v203
      %v284 = vunpack.c.l.b16 %v204
      %v285 = vunpack.c.l.b16 %v205
      %v286 = vunpack.c.l.b16 %v206
      %v287 = vunpack.c.l.b16 %v207
      %v288 = vunpack.c.l.b16 %v208
      %v289 = vunpack.c.l.b16 %v209
      %v290 = vunpack.c.l.b16 %v210
      %v291 = vunpack.c.l.b16 %v211
      %v292 = vunpack.c.l.b16 %v212
      %v293 = vunpack.c.l.b16 %v213
      %v294 = vunpack.c.l.b16 %v214
      %v295 = vunpack.c.l.b16 %v215
      %v296 = vpack.c.b16 %v265, %v264
      %v297 = vpack.c.b16 %v267, %v266
      %v298 = vpack.c.b16 %v269, %v268
      %v299 = vpack.c.b16 %v271, %v270
      %v300 = vpack.c.b16 %v273, %v272
      %v301 = vpack.c.b16 %v275, %v274
      %v302 = vpack.c.b16 %v277, %v276
      %v303 = vpack.c.b16 %v279, %v278
      %v304 = vpack.c.b16 %v281, %v280
      %v305 = vpack.c.b16 %v283, %v282
      %v306 = vpack.c.b16 %v285, %v284
      %v307 = vpack.c.b16 %v287, %v286
      %v308 = vpack.c.b16 %v289, %v288
      %v309 = vpack.c.b16 %v291, %v290
      %v310 = vpack.c.b16 %v293, %v292
      %v311 = vpack.c.b16 %v295, %v294
      %v344 = vunpack.c.l.b16 %v216
      %v345 = vunpack.c.l.b16 %v217
      %v346 = vunpack.c.l.b16 %v218
      %v347 = vunpack.c.l.b16 %v219
      %v348 = vunpack.c.l.b16 %v220
      %v349 = vunpack.c.l.b16 %v221
      %v350 = vunpack.c.l.b16 %v222
      %v351 = vunpack.c.l.b16 %v223
      %v352 = vunpack.c.l.b16 %v224
      %v353 = vunpack.c.l.b16 %v225
      %v354 = vunpack.c.l.b16 %v226
      %v355 = vunpack.c.l.b16 %v227
      %v356 = vunpack.c.l.b16 %v228
      %v357 = vunpack.c.l.b16 %v229
      %v358 = vunpack.c.l.b16 %v230
      %v359 = vunpack.c.l.b16 %v231
      %v360 = vpack.c.b16 %v345, %v344
      %v361 = vpack.c.b16 %v347, %v346
      %v362 = vpack.c.b16 %v349, %v348
      %v363 = vpack.c.b16 %v351, %v350
      %v364 = vpack.c.b16 %v353, %v352
      %v365 = vpack.c.b16 %v355, %v354
      %v366 = vpack.c.b16 %v357, %v356
      %v367 = vpack.c.b16 %v359, %v358
      %376 = vmatprep.subr.bf16.mxu0 0
      %377 = vmatpush1.bf16.msra.mxu0 %v360
      %378 = vmatprep.subr.bf16.mxu0 0
      %379 = vmatpush1.bf16.msra.mxu0 %v361
      %380 = vmatprep.subr.bf16.mxu0 0
      %381 = vmatpush1.bf16.msra.mxu0 %v362
      %382 = vmatprep.subr.bf16.mxu0 0
      %383 = vmatpush1.bf16.msra.mxu0 %v363
      %384 = vmatprep.subr.bf16.mxu0 0
      %385 = vmatpush1.bf16.msra.mxu0 %v364
      %386 = vmatprep.subr.bf16.mxu0 0
      %387 = vmatpush1.bf16.msra.mxu0 %v365
      %388 = vmatprep.subr.bf16.mxu0 0
      %389 = vmatpush1.bf16.msra.mxu0 %v366
      %390 = vmatprep.subr.bf16.mxu0 0
      %391 = vmatpush1.bf16.msra.mxu0 %v367
      %392 = vmatprep.subr.bf16.mxu0 0
      %393 = vmatpush1.bf16.msra.mxu0 0
      %394 = vmatprep.subr.bf16.mxu0 0
      %395 = vmatpush1.bf16.msra.mxu0 0
      %396 = vmatprep.subr.bf16.mxu0 0
      %397 = vmatpush1.bf16.msra.mxu0 0
      %398 = vmatprep.subr.bf16.mxu0 0
      %399 = vmatpush1.bf16.msra.mxu0 0
      %400 = vmatprep.subr.bf16.mxu0 0
      %401 = vmatpush1.bf16.msra.mxu0 0
      %402 = vmatprep.subr.bf16.mxu0 0
      %403 = vmatpush1.bf16.msra.mxu0 0
      %404 = vmatprep.subr.bf16.mxu0 0
      %405 = vmatpush1.bf16.msra.mxu0 0
      %406 = vmatprep.subr.bf16.mxu0 0
      %407 = vmatpush1.bf16.msra.mxu0 0
      %408 = vmatprep.mubr.bf16.mxu0 0
      %409 = vmatmul.mubr.bf16.gmra.mrb[0].mxu0 %v296
      %v410 = vpop.f32.mrb[0].mxu0
      %v411 = vadd.f32 0.0, %v410
      %v412 = vpop.f32.mrb[0].mxu0
      %v413 = vpop.f32.mrb[0].mxu0
      %v414 = vadd.f32 0.0, %v413
      %v415 = vpop.f32.mrb[0].mxu0
      %416 = vmatprep.mubr.bf16.mxu0 0
      %417 = vmatmul.mubr.bf16.gmra.mrb[0].mxu0 %v297
      %v418 = vpop.f32.mrb[0].mxu0
      %v419 = vadd.f32 0.0, %v418
      %v420 = vpop.f32.mrb[0].mxu0
      %v421 = vpop.f32.mrb[0].mxu0
      %v422 = vadd.f32 0.0, %v421
      %v423 = vpop.f32.mrb[0].mxu0
      %424 = vmatprep.mubr.bf16.mxu0 0
      %425 = vmatmul.mubr.bf16.gmra.mrb[0].mxu0 %v298
      %v426 = vpop.f32.mrb[0].mxu0
      %v427 = vadd.f32 0.0, %v426
      %v428 = vpop.f32.mrb[0].mxu0
      %v429 = vpop.f32.mrb[0].mxu0
      %v430 = vadd.f32 0.0, %v429
      %v431 = vpop.f32.mrb[0].mxu0
      %432 = vmatprep.mubr.bf16.mxu0 0
      %433 = vmatmul.mubr.bf16.gmra.mrb[0].mxu0 %v299
      %v434 = vpop.f32.mrb[0].mxu0
      %v435 = vadd.f32 0.0, %v434
      %v436 = vpop.f32.mrb[0].mxu0
      %v437 = vpop.f32.mrb[0].mxu0
      %v438 = vadd.f32 0.0, %v437
      %v439 = vpop.f32.mrb[0].mxu0
      %440 = vmatprep.mubr.bf16.mxu0 0
      %441 = vmatmul.mubr.bf16.gmra.mrb[0].mxu0 %v300
      %v442 = vpop.f32.mrb[0].mxu0
      %v443 = vadd.f32 0.0, %v442
      %v444 = vpop.f32.mrb[0].mxu0
      %v445 = vpop.f32.mrb[0].mxu0
      %v446 = vadd.f32 0.0, %v445
      %v447 = vpop.f32.mrb[0].mxu0
      %448 = vmatprep.mubr.bf16.mxu0 0
      %449 = vmatmul.mubr.bf16.gmra.mrb[0].mxu0 %v301
      %v450 = vpop.f32.mrb[0].mxu0
      %v451 = vadd.f32 0.0, %v450
      %v452 = vpop.f32.mrb[0].mxu0
      %v453 = vpop.f32.mrb[0].mxu0
      %v454 = vadd.f32 0.0, %v453
      %v455 = vpop.f32.mrb[0].mxu0
      %456 = vmatprep.mubr.bf16.mxu0 0
      %457 = vmatmul.mubr.bf16.gmra.mrb[0].mxu0 %v302
      %v458 = vpop.f32.mrb[0].mxu0
      %v459 = vadd.f32 0.0, %v458
      %v460 = vpop.f32.mrb[0].mxu0
      %v461 = vpop.f32.mrb[0].mxu0
      %v462 = vadd.f32 0.0, %v461
      %v463 = vpop.f32.mrb[0].mxu0
      %464 = vmatprep.mubr.bf16.mxu0 0
      %465 = vmatmul.mubr.bf16.gmra.mrb[0].mxu0 %v303
      %v466 = vpop.f32.mrb[0].mxu0
      %v467 = vadd.f32 0.0, %v466
      %v468 = vpop.f32.mrb[0].mxu0
      %v469 = vpop.f32.mrb[0].mxu0
      %v470 = vadd.f32 0.0, %v469
      %v471 = vpop.f32.mrb[0].mxu0
      %472 = vmatprep.mubr.bf16.mxu0 0
      %473 = vmatmul.mubr.bf16.gmra.mrb[0].mxu0 %v304
      %v474 = vpop.f32.mrb[0].mxu0
      %v475 = vadd.f32 0.0, %v474
      %v476 = vpop.f32.mrb[0].mxu0
      %v477 = vpop.f32.mrb[0].mxu0
      %v478 = vadd.f32 0.0, %v477
      %v479 = vpop.f32.mrb[0].mxu0
      %480 = vmatprep.mubr.bf16.mxu0 0
      %481 = vmatmul.mubr.bf16.gmra.mrb[0].mxu0 %v305
      %v482 = vpop.f32.mrb[0].mxu0
      %v483 = vadd.f32 0.0, %v482
      %v484 = vpop.f32.mrb[0].mxu0
      %v485 = vpop.f32.mrb[0].mxu0
      %v486 = vadd.f32 0.0, %v485
      %v487 = vpop.f32.mrb[0].mxu0
      %488 = vmatprep.mubr.bf16.mxu0 0
      %489 = vmatmul.mubr.bf16.gmra.mrb[0].mxu0 %v306
      %v490 = vpop.f32.mrb[0].mxu0
      %v491 = vadd.f32 0.0, %v490
      %v492 = vpop.f32.mrb[0].mxu0
      %v493 = vpop.f32.mrb[0].mxu0
      %v494 = vadd.f32 0.0, %v493
      %v495 = vpop.f32.mrb[0].mxu0
      %496 = vmatprep.mubr.bf16.mxu0 0
      %497 = vmatmul.mubr.bf16.gmra.mrb[0].mxu0 %v307
      %v498 = vpop.f32.mrb[0].mxu0
      %v499 = vadd.f32 0.0, %v498
      %v500 = vpop.f32.mrb[0].mxu0
      %v501 = vpop.f32.mrb[0].mxu0
      %v502 = vadd.f32 0.0, %v501
      %v503 = vpop.f32.mrb[0].mxu0
      %504 = vmatprep.mubr.bf16.mxu0 0
      %505 = vmatmul.mubr.bf16.gmra.mrb[0].mxu0 %v308
      %v506 = vpop.f32.mrb[0].mxu0
      %v507 = vadd.f32 0.0, %v506
      %v508 = vpop.f32.mrb[0].mxu0
      %v509 = vpop.f32.mrb[0].mxu0
      %v510 = vadd.f32 0.0, %v509
      %v511 = vpop.f32.mrb[0].mxu0
      %512 = vmatprep.mubr.bf16.mxu0 0
      %513 = vmatmul.mubr.bf16.gmra.mrb[0].mxu0 %v309
      %v514 = vpop.f32.mrb[0].mxu0
      %v515 = vadd.f32 0.0, %v514
      %v516 = vpop.f32.mrb[0].mxu0
      %v517 = vpop.f32.mrb[0].mxu0
      %v518 = vadd.f32 0.0, %v517
      %v519 = vpop.f32.mrb[0].mxu0
      %520 = vmatprep.mubr.bf16.mxu0 0
      %521 = vmatmul.mubr.bf16.gmra.mrb[0].mxu0 %v310
      %v522 = vpop.f32.mrb[0].mxu0
      %v523 = vadd.f32 0.0, %v522
      %v524 = vpop.f32.mrb[0].mxu0
      %v525 = vpop.f32.mrb[0].mxu0
      %v526 = vadd.f32 0.0, %v525
      %v527 = vpop.f32.mrb[0].mxu0
      %528 = vmatprep.mubr.bf16.mxu0 0
      %529 = vmatmul.mubr.bf16.gmra.mrb[0].mxu0 %v311
      %v530 = vpop.f32.mrb[0].mxu0
      %v531 = vadd.f32 0.0, %v530
      %v532 = vpop.f32.mrb[0].mxu0
      %v533 = vpop.f32.mrb[0].mxu0
      %v534 = vadd.f32 0.0, %v533
      %v535 = vpop.f32.mrb[0].mxu0
      %536 = vdwg.mxu0
      %v537 = vpack.c.bf16 %v414, %v411
      %v538 = vpack.c.bf16 %v422, %v419
      %v539 = vpack.c.bf16 %v430, %v427
      %v540 = vpack.c.bf16 %v438, %v435
      %v541 = vpack.c.bf16 %v446, %v443
      %v542 = vpack.c.bf16 %v454, %v451
      %v543 = vpack.c.bf16 %v462, %v459
      %v544 = vpack.c.bf16 %v470, %v467
      %v545 = vpack.c.bf16 %v478, %v475
      %v546 = vpack.c.bf16 %v486, %v483
      %v547 = vpack.c.bf16 %v494, %v491
      %v548 = vpack.c.bf16 %v502, %v499
      %v549 = vpack.c.bf16 %v510, %v507
      %v550 = vpack.c.bf16 %v518, %v515
      %v551 = vpack.c.bf16 %v526, %v523
      %v552 = vpack.c.bf16 %v534, %v531
      %v569 = vunpack.c.l.b16 %v537
      %v570 = vunpack.c.h.b16 %v537
      %v571 = vunpack.c.l.b16 %v538
      %v572 = vunpack.c.h.b16 %v538
      %v573 = vunpack.c.l.b16 %v539
      %v574 = vunpack.c.h.b16 %v539
      %v575 = vunpack.c.l.b16 %v540
      %v576 = vunpack.c.h.b16 %v540
      %v577 = vunpack.c.l.b16 %v541
      %v578 = vunpack.c.h.b16 %v541
      %v579 = vunpack.c.l.b16 %v542
      %v580 = vunpack.c.h.b16 %v542
      %v581 = vunpack.c.l.b16 %v543
      %v582 = vunpack.c.h.b16 %v543
      %v583 = vunpack.c.l.b16 %v544
      %v584 = vunpack.c.h.b16 %v544
      %v585 = vunpack.c.l.b16 %v545
      %v586 = vunpack.c.h.b16 %v545
      %v587 = vunpack.c.l.b16 %v546
      %v588 = vunpack.c.h.b16 %v546
      %v589 = vunpack.c.l.b16 %v547
      %v590 = vunpack.c.h.b16 %v547
      %v591 = vunpack.c.l.b16 %v548
      %v592 = vunpack.c.h.b16 %v548
      %v593 = vunpack.c.l.b16 %v549
      %v594 = vunpack.c.h.b16 %v549
      %v595 = vunpack.c.l.b16 %v550
      %v596 = vunpack.c.h.b16 %v550
      %v597 = vunpack.c.l.b16 %v551
      %v598 = vunpack.c.h.b16 %v551
      %v599 = vunpack.c.l.b16 %v552
      %v600 = vunpack.c.h.b16 %v552
      %v601 = vpack.c.b16 %v569, %v569
      %v602 = vpack.c.b16 %v570, %v570
      %v603 = vpack.c.b16 %v571, %v571
      %v604 = vpack.c.b16 %v572, %v572
      %v605 = vpack.c.b16 %v573, %v573
      %v606 = vpack.c.b16 %v574, %v574
      %v607 = vpack.c.b16 %v575, %v575
      %v608 = vpack.c.b16 %v576, %v576
      %v609 = vpack.c.b16 %v577, %v577
      %v610 = vpack.c.b16 %v578, %v578
      %v611 = vpack.c.b16 %v579, %v579
      %v612 = vpack.c.b16 %v580, %v580
      %v613 = vpack.c.b16 %v581, %v581
      %v614 = vpack.c.b16 %v582, %v582
      %v615 = vpack.c.b16 %v583, %v583
      %v616 = vpack.c.b16 %v584, %v584
      %v617 = vpack.c.b16 %v585, %v585
      %v618 = vpack.c.b16 %v586, %v586
      %v619 = vpack.c.b16 %v587, %v587
      %v620 = vpack.c.b16 %v588, %v588
      %v621 = vpack.c.b16 %v589, %v589
      %v622 = vpack.c.b16 %v590, %v590
      %v623 = vpack.c.b16 %v591, %v591
      %v624 = vpack.c.b16 %v592, %v592
      %v625 = vpack.c.b16 %v593, %v593
      %v626 = vpack.c.b16 %v594, %v594
      %v627 = vpack.c.b16 %v595, %v595
      %v628 = vpack.c.b16 %v596, %v596
      %v629 = vpack.c.b16 %v597, %v597
      %v630 = vpack.c.b16 %v598, %v598
      %v631 = vpack.c.b16 %v599, %v599
      %v632 = vpack.c.b16 %v600, %v600
      %665 = vst [vmem:[%s181] sm:$0xf] %v601
      %666 = vst [vmem:[%s181 + $0x4] sm:$0xf] %v602
      %667 = vst [vmem:[%s181 + $0x8] sm:$0xf] %v603
      %668 = vst [vmem:[%s181 + $0xc] sm:$0xf] %v604
      %669 = vst [vmem:[%s181 + $0x10] sm:$0xf] %v605
      %670 = vst [vmem:[%s181 + $0x14] sm:$0xf] %v606
      %671 = vst [vmem:[%s181 + $0x18] sm:$0xf] %v607
      %672 = vst [vmem:[%s181 + $0x1c] sm:$0xf] %v608
      %673 = vst [vmem:[%s181 + $0x20] sm:$0xf] %v609
      %674 = vst [vmem:[%s181 + $0x24] sm:$0xf] %v610
      %675 = vst [vmem:[%s181 + $0x28] sm:$0xf] %v611
      %676 = vst [vmem:[%s181 + $0x2c] sm:$0xf] %v612
      %677 = vst [vmem:[%s181 + $0x30] sm:$0xf] %v613
      %678 = vst [vmem:[%s181 + $0x34] sm:$0xf] %v614
      %679 = vst [vmem:[%s181 + $0x38] sm:$0xf] %v615
      %680 = vst [vmem:[%s181 + $0x3c] sm:$0xf] %v616
      %681 = vst [vmem:[%s181 + $0x40] sm:$0xf] %v617
      %682 = vst [vmem:[%s181 + $0x44] sm:$0xf] %v618
      %683 = vst [vmem:[%s181 + $0x48] sm:$0xf] %v619
      %684 = vst [vmem:[%s181 + $0x4c] sm:$0xf] %v620
      %685 = vst [vmem:[%s181 + $0x50] sm:$0xf] %v621
      %686 = vst [vmem:[%s181 + $0x54] sm:$0xf] %v622
      %687 = vst [vmem:[%s181 + $0x58] sm:$0xf] %v623
      %688 = vst [vmem:[%s181 + $0x5c] sm:$0xf] %v624
      %689 = vst [vmem:[%s181 + $0x60] sm:$0xf] %v625
      %690 = vst [vmem:[%s181 + $0x64] sm:$0xf] %v626
      %691 = vst [vmem:[%s181 + $0x68] sm:$0xf] %v627
      %692 = vst [vmem:[%s181 + $0x6c] sm:$0xf] %v628
      %693 = vst [vmem:[%s181 + $0x70] sm:$0xf] %v629
      %694 = vst [vmem:[%s181 + $0x74] sm:$0xf] %v630
      %695 = vst [vmem:[%s181 + $0x78] sm:$0xf] %v631
      %696 = vst [vmem:[%s181 + $0x7c] sm:$0xf] %v632
      %s697 = smul.u32 32, %s18
      %p698 = scmp.lt.s32.totalorder %s17, 1
      %s699 = scalar_select %p698, %s17, 1
      %p700 = scmp.lt.s32.totalorder %s697, 63
      %s701 = scalar_select %p700, %s697, 63
      %s702 = smul.addr %s699, 64
      %s703 = sadd.s32 %s701, %s702
      %s704 = smul.addr %s703, 4
      %s705 = scalar_lea.vmem %s2, %s704
      // Predicated region
      $region29: #{unet_block_forward.3} parent=27 // pred_check
        %p706 = pneg %p94
      $region30: #{unet_block_forward.3} parent=27 // pred_check_branch
        %708 = sbr.rel (%p706) target = $region32
      $region31: #{unet_block_forward.3} parent=27 // pred_region
        %s709 = smul.u32 32, %s18
      $region32: #{unet_block_forward.3} parent=27 // pred_fallthru
        _
    $region28: #{unet_block_forward.3} parent=5 // pred_fallthru
      _
    %p710 = scmp.le.s32.totalorder 2, %s8
    // Predicated region
    $region33: #{unet_block_forward.3} parent=5 // pred_check
      %p711 = pneg %p710
    $region34: #{unet_block_forward.3} parent=5 // pred_check_branch
      %713 = sbr.rel (%p711) target = $region36
    $region35: #{unet_block_forward.3} parent=5 // pred_region
      %s714 = ssub.s32 %s8, 2
      // Predicated region
      $region37: #{unet_block_forward.3} parent=35 // pred_check
        %p715 = pneg %p100
      $region38: #{unet_block_forward.3} parent=35 // pred_check_branch
        %717 = sbr.rel (%p715) target = $region40
      $region39: #{unet_block_forward.3} parent=35 // pred_region
        %s718 = smul.u32 32, %s20
        %p719 = scmp.lt.s32.totalorder %s19, 1
        %s720 = scalar_select %p719, %s19, 1
        %p721 = scmp.lt.s32.totalorder %s718, 63
        %s722 = scalar_select %p721, %s718, 63
        %s723 = smul.addr %s720, 64
        %s724 = sadd.s32 %s722, %s723
        %s725 = smul.addr %s724, 4
        %s726 = scalar_lea.vmem %s2, %s725
      $region40: #{unet_block_forward.3} parent=35 // pred_fallthru
        _
    $region36: #{unet_block_forward.3} parent=5 // pred_fallthru
      _
  $region6: #{unet_block_forward.3} parent=0 // loop_footer
    %s12 = sadd.s32 1, %s8
  $region7: #{unet_block_forward.3} parent=0 // loop_footer_branch
    %7 = sbr.rel target = $region3
  $region8: #{unet_block_forward.3} parent=0 // loop_exit
    _

// kernel: unet_block_forward.4
$region0: #{unet_block_forward.4}
  #allocation0 [shape = 'u32[]', space=smem, size = 0x4, offset = 0x4, fixed_abs, tag = 'smem constant byte address 0x4 - core index']
  #allocation1 [shape = 'u32[144,128]{1,0:T(1,128)}', space=vmem, size = 0x12000, scoped, tag = 'internal scratch']
  %s0 = inlined_call_operand.vmem [shape: bf16[2,4096,128], index: 0, kind: input, shape index: {}]
  %s1 = inlined_call_operand.vmem [shape: bf16[128,128], index: 1, kind: input, shape index: {}]
  %s2 = inlined_call_operand.vmem [shape: bf16[2,4096,128], index: 2, kind: output, shape index: {0}]
  %s3 = inlined_call_operand.vmem [shape: f32[2,1,128], index: 3, kind: output, shape index: {1}]
  %s4 = inlined_call_operand.vmem [shape: f32[2,1,128], index: 4, kind: output, shape index: {2}]
  %5 = xla_tuple %s2, %s3, %s4
  %s6 = sld [smem:[#allocation0]]
  $region65: #{unet_block_forward.4} parent=0
    _
  %s8 = ssub.s32 1, %s6
  %s9 = scalar_select 0, %s8, %s6
  loop: start=0, step=1, limit=34
  $region2: #{unet_block_forward.4} parent=0 // loop_pre_header
    _
  $region3: #{unet_block_forward.4} parent=0 // loop_header
    %s11 = sphi 0, %s15
    %p12 = scmp.ge.s32.totalorder %s11, 34
    %s18 = sphi 0, %s30
    %s19 = sphi 0, %s26
    %s20 = sphi 0, %s18
    %s21 = sphi 0, %s19
    %s22 = sphi 0, %s20
    %s23 = sphi 0, %s21
    %s35 = sphi 0, %s37
    %s38 = sphi 0, %s35
    %s39 = sphi 0, %s38
    %s55 = sphi 0, %s39
    %s59 = sphi 0, %s59
    %s61 = sphi 0, %s59
    %s62 = sphi 0, %s61
    %s76 = sphi 0, %s62
    %s84 = sphi 0, %s86
    %s87 = sphi 0, %s84
    %s88 = sphi 0, %s87
    %s104 = sphi 0, %s88
    %s110 = sphi 0, %s112
    %s113 = sphi 0, %s110
    %s114 = sphi 0, %s113
    %s130 = sphi 0, %s114
    %s136 = sphi 0, %s138
    %s139 = sphi 0, %s136
    %s140 = sphi 0, %s139
    %s156 = sphi 0, %s140
  $region4: #{unet_block_forward.4} parent=0 // loop_header_branch
    %14 = sbr.rel (%p12) target = $region8
  $region5: #{unet_block_forward.4} parent=0 // loop_body
    %s16 = ssub.s32 %s11, 1
    %s17 = ssub.s32 %s11, 2
    %s24 = sadd.s32 1, %s19
    %p25 = scmp.ge.s32.totalorder %s24, 16
    %s26 = scalar_select %p25, 0, %s24
    %s27 = sadd.s32 1, %s18
    %s28 = scalar_select %p25, %s27, %s18
    %p29 = scmp.ge.s32.totalorder %s28, 2
    %s30 = scalar_select %p29, 0, %s28
    %s31 = ssub.s32 %s18, %s30
    %s32 = ssub.s32 %s19, %s26
    %s33 = sor.u32 %s31, %s32
    %p34 = scmp.eq.s32.totalorder %s33, 0
    %s36 = sadd.s32 %s35, 1
    %s37 = scalar_select %p34, %s35, %s36
    %p40 = pneg %p34
    %p41 = scmp.eq.s32.totalorder %s11, 31
    %p42 = por %p40, %p41
    %p43 = scmp.ne.s32.totalorder %s35, %s38
    %p44 = scmp.eq.s32.totalorder %s11, 0
    %p45 = por %p43, %p44
    %p46 = scmp.ne.s32.totalorder %s35, %s38
    %p47 = scmp.eq.s32.totalorder %s16, 31
    %p48 = por %p46, %p47
    %p49 = scmp.ne.s32.totalorder %s38, %s39
    %p50 = scmp.eq.s32.totalorder %s16, 0
    %p51 = por %p49, %p50
    %p52 = scmp.ne.s32.totalorder %s38, %s39
    %p53 = scmp.eq.s32.totalorder %s17, 31
    %p54 = por %p52, %p53
    %p56 = scmp.ne.s32.totalorder %s39, %s55
    %p57 = scmp.eq.s32.totalorder %s17, 0
    %p58 = por %p56, %p57
    %s60 = sadd.s32 %s59, 1
    %p63 = scmp.eq.s32.totalorder %s11, 31
    %p64 = scmp.ne.s32.totalorder %s59, %s61
    %p65 = scmp.eq.s32.totalorder %s11, 0
    %p66 = por %p64, %p65
    %p67 = scmp.ne.s32.totalorder %s59, %s61
    %p68 = scmp.eq.s32.totalorder %s16, 31
    %p69 = por %p67, %p68
    %p70 = scmp.ne.s32.totalorder %s61, %s62
    %p71 = scmp.eq.s32.totalorder %s16, 0
    %p72 = por %p70, %p71
    %p73 = scmp.ne.s32.totalorder %s61, %s62
    %p74 = scmp.eq.s32.totalorder %s17, 31
    %p75 = por %p73, %p74
    %p77 = scmp.ne.s32.totalorder %s62, %s76
    %p78 = scmp.eq.s32.totalorder %s17, 0
    %p79 = por %p77, %p78
    %s80 = ssub.s32 %s18, %s30
    %s81 = ssub.s32 %s19, %s26
    %s82 = sor.u32 %s80, %s81
    %p83 = scmp.eq.s32.totalorder %s82, 0
    %s85 = sadd.s32 %s84, 1
    %s86 = scalar_select %p83, %s84, %s85
    %p89 = pneg %p83
    %p90 = scmp.eq.s32.totalorder %s11, 31
    %p91 = por %p89, %p90
    %p92 = scmp.ne.s32.totalorder %s84, %s87
    %p93 = scmp.eq.s32.totalorder %s11, 0
    %p94 = por %p92, %p93
    %p95 = scmp.ne.s32.totalorder %s84, %s87
    %p96 = scmp.eq.s32.totalorder %s16, 31
    %p97 = por %p95, %p96
    %p98 = scmp.ne.s32.totalorder %s87, %s88
    %p99 = scmp.eq.s32.totalorder %s16, 0
    %p100 = por %p98, %p99
    %p101 = scmp.ne.s32.totalorder %s87, %s88
    %p102 = scmp.eq.s32.totalorder %s17, 31
    %p103 = por %p101, %p102
    %p105 = scmp.ne.s32.totalorder %s88, %s104
    %p106 = scmp.eq.s32.totalorder %s17, 0
    %p107 = por %p105, %p106
    %s108 = ssub.s32 %s18, %s30
    %p109 = scmp.eq.s32.totalorder %s108, 0
    %s111 = sadd.s32 %s110, 1
    %s112 = scalar_select %p109, %s110, %s111
    %p115 = pneg %p109
    %p116 = scmp.eq.s32.totalorder %s11, 31
    %p117 = por %p115, %p116
    %p118 = scmp.ne.s32.totalorder %s110, %s113
    %p119 = scmp.eq.s32.totalorder %s11, 0
    %p120 = por %p118, %p119
    %p121 = scmp.ne.s32.totalorder %s110, %s113
    %p122 = scmp.eq.s32.totalorder %s16, 31
    %p123 = por %p121, %p122
    %p124 = scmp.ne.s32.totalorder %s113, %s114
    %p125 = scmp.eq.s32.totalorder %s16, 0
    %p126 = por %p124, %p125
    %p127 = scmp.ne.s32.totalorder %s113, %s114
    %p128 = scmp.eq.s32.totalorder %s17, 31
    %p129 = por %p127, %p128
    %p131 = scmp.ne.s32.totalorder %s114, %s130
    %p132 = scmp.eq.s32.totalorder %s17, 0
    %p133 = por %p131, %p132
    %s134 = ssub.s32 %s18, %s30
    %p135 = scmp.eq.s32.totalorder %s134, 0
    %s137 = sadd.s32 %s136, 1
    %s138 = scalar_select %p135, %s136, %s137
    %p141 = pneg %p135
    %p142 = scmp.eq.s32.totalorder %s11, 31
    %p143 = por %p141, %p142
    %p144 = scmp.ne.s32.totalorder %s136, %s139
    %p145 = scmp.eq.s32.totalorder %s11, 0
    %p146 = por %p144, %p145
    %p147 = scmp.ne.s32.totalorder %s136, %s139
    %p148 = scmp.eq.s32.totalorder %s16, 31
    %p149 = por %p147, %p148
    %p150 = scmp.ne.s32.totalorder %s139, %s140
    %p151 = scmp.eq.s32.totalorder %s16, 0
    %p152 = por %p150, %p151
    %p153 = scmp.ne.s32.totalorder %s139, %s140
    %p154 = scmp.eq.s32.totalorder %s17, 31
    %p155 = por %p153, %p154
    %p157 = scmp.ne.s32.totalorder %s140, %s156
    %p158 = scmp.eq.s32.totalorder %s17, 0
    %p159 = por %p157, %p158
    %p160 = scmp.le.s32.totalorder 1, %s11
    %p161 = scmp.lt.s32.totalorder %s11, 33
    %p162 = pnand %p160, %p161
    %p163 = pneg %p162
    // Predicated region
    $region9: #{unet_block_forward.4} parent=5 // pred_check
      _
    $region10: #{unet_block_forward.4} parent=5 // pred_check_branch
      %165 = sbr.rel (%p162) target = $region12
    $region11: #{unet_block_forward.4} parent=5 // pred_region
      %s166 = ssub.s32 %s11, 1
      // Predicated region
      $region13: #{unet_block_forward.4} parent=11 // pred_check
        %p167 = pneg %p72
      $region14: #{unet_block_forward.4} parent=11 // pred_check_branch
        %169 = sbr.rel (%p167) target = $region16
      $region15: #{unet_block_forward.4} parent=11 // pred_region
        _
      $region16: #{unet_block_forward.4} parent=11 // pred_fallthru
        _
    $region12: #{unet_block_forward.4} parent=5 // pred_fallthru
      _
    %p170 = scmp.lt.s32.totalorder %s11, 32
    // Predicated region
    $region17: #{unet_block_forward.4} parent=5 // pred_check
      %p171 = pneg %p170
    $region18: #{unet_block_forward.4} parent=5 // pred_check_branch
      %173 = sbr.rel (%p171) target = $region20
    $region19: #{unet_block_forward.4} parent=5 // pred_region
      // Predicated region
      $region21: #{unet_block_forward.4} parent=19 // pred_check
        %p174 = pneg %p45
      $region22: #{unet_block_forward.4} parent=19 // pred_check_branch
        %176 = sbr.rel (%p174) target = $region24
      $region23: #{unet_block_forward.4} parent=19 // pred_region
        %s177 = smul.u32 32, %s19
        %p178 = scmp.lt.s32.totalorder %s18, 1
        %s179 = scalar_select %p178, %s18, 1
        %p180 = scmp.lt.s32.totalorder %s177, 511
        %s181 = scalar_select %p180, %s177, 511
        %s182 = smul.addr %s179, 512
        %s183 = sadd.s32 %s181, %s182
        %s184 = smul.addr %s183, 4
        %s185 = scalar_lea.vmem %s0, %s184
        %s186 = smul.u32 32, %s19
      $region24: #{unet_block_forward.4} parent=19 // pred_fallthru
        _
    $region20: #{unet_block_forward.4} parent=5 // pred_fallthru
      _
    %p187 = scmp.le.s32.totalorder 1, %s11
    %p188 = scmp.lt.s32.totalorder %s11, 33
    %p189 = pnand %p187, %p188
    %p190 = pneg %p189
    // Predicated region
    $region25: #{unet_block_forward.4} parent=5 // pred_check
      _
    $region26: #{unet_block_forward.4} parent=5 // pred_check_branch
      %192 = sbr.rel (%p189) target = $region28
    $region27: #{unet_block_forward.4} parent=5 // pred_region
      %s193 = ssub.s32 %s11, 1
      %s194 = smul.u32 32, %s21
      %p195 = scmp.lt.s32.totalorder %s20, 1
      %s196 = scalar_select %p195, %s20, 1
      %p197 = scmp.lt.s32.totalorder %s194, 511
      %s198 = scalar_select %p197, %s194, 511
      %s199 = smul.addr %s196, 512
      %s200 = sadd.s32 %s198, %s199
      %s201 = smul.addr %s200, 4
      %s202 = scalar_lea.vmem %s0, %s201
      %p203 = pneg %p51
      %p204 = pneg %p48
      %p205 = pneg %p72
      %p206 = pneg %p69
      %p207 = pneg %p100
      %p208 = pneg %p97
      %s209 = smul.u32 32, %s21
      %p210 = scmp.lt.s32.totalorder %s20, 1
      %s211 = scalar_select %p210, %s20, 1
      %p212 = scmp.lt.s32.totalorder %s209, 511
      %s213 = scalar_select %p212, %s209, 511
      %s214 = smul.addr %s211, 512
      %s215 = sadd.s32 %s213, %s214
      %s216 = smul.addr %s215, 4
      %s217 = scalar_lea.vmem %s2, %s216
      %p218 = pneg %p126
      %p219 = pneg %p123
      %p220 = scmp.lt.s32.totalorder %s20, 1
      %s221 = scalar_select %p220, %s20, 1
      %s222 = scalar_lea.vmem %s3, %s221
      %p223 = pneg %p152
      %p224 = pneg %p149
      %p225 = scmp.lt.s32.totalorder %s20, 1
      %s226 = scalar_select %p225, %s20, 1
      %s227 = scalar_lea.vmem %s4, %s226
      %s228 = smul.u32 32, %s21
      %p229 = scmp.lt.s32.totalorder %s20, 1
      %s230 = scalar_select %p229, %s20, 1
      %p231 = scmp.lt.s32.totalorder %s228, 511
      %s232 = scalar_select %p231, %s228, 511
      %s233 = smul.addr %s230, 512
      %s234 = sadd.s32 %s232, %s233
      %s235 = smul.addr %s234, 4
      %s236 = scalar_lea.vmem %s0, %s235
      %s237 = smul.u32 32, %s21
      %s238 = smul.u32 32, %s21
      %p239 = scmp.lt.s32.totalorder %s20, 1
      %s240 = scalar_select %p239, %s20, 1
      %p241 = scmp.lt.s32.totalorder %s238, 511
      %s242 = scalar_select %p241, %s238, 511
      %s243 = smul.addr %s240, 512
      %s244 = sadd.s32 %s242, %s243
      %s245 = smul.addr %s244, 4
      %s246 = scalar_lea.vmem %s2, %s245
      %s247 = smul.u32 32, %s21
      %p248 = scmp.lt.s32.totalorder %s20, 1
      %s249 = scalar_select %p248, %s20, 1
      %s250 = scalar_lea.vmem %s3, %s249
      %p251 = scmp.lt.s32.totalorder %s20, 1
      %s252 = scalar_select %p251, %s20, 1
      %s253 = scalar_lea.vmem %s4, %s252
      %v255 = vld [vmem:[%s236] sm:$0xf]
      %v256 = vld [vmem:[%s236 + $0x4] sm:$0xf]
      %v257 = vld [vmem:[%s236 + $0x8] sm:$0xf]
      %v258 = vld [vmem:[%s236 + $0xc] sm:$0xf]
      %v259 = vld [vmem:[%s236 + $0x10] sm:$0xf]
      %v260 = vld [vmem:[%s236 + $0x14] sm:$0xf]
      %v261 = vld [vmem:[%s236 + $0x18] sm:$0xf]
      %v262 = vld [vmem:[%s236 + $0x1c] sm:$0xf]
      %v263 = vld [vmem:[%s236 + $0x20] sm:$0xf]
      %v264 = vld [vmem:[%s236 + $0x24] sm:$0xf]
      %v265 = vld [vmem:[%s236 + $0x28] sm:$0xf]
      %v266 = vld [vmem:[%s236 + $0x2c] sm:$0xf]
      %v267 = vld [vmem:[%s236 + $0x30] sm:$0xf]
      %v268 = vld [vmem:[%s236 + $0x34] sm:$0xf]
      %v269 = vld [vmem:[%s236 + $0x38] sm:$0xf]
      %v270 = vld [vmem:[%s236 + $0x3c] sm:$0xf]
      %v271 = vld [vmem:[%s236 + $0x40] sm:$0xf]
      %v272 = vld [vmem:[%s236 + $0x44] sm:$0xf]
      %v273 = vld [vmem:[%s236 + $0x48] sm:$0xf]
      %v274 = vld [vmem:[%s236 + $0x4c] sm:$0xf]
      %v275 = vld [vmem:[%s236 + $0x50] sm:$0xf]
      %v276 = vld [vmem:[%s236 + $0x54] sm:$0xf]
      %v277 = vld [vmem:[%s236 + $0x58] sm:$0xf]
      %v278 = vld [vmem:[%s236 + $0x5c] sm:$0xf]
      %v279 = vld [vmem:[%s236 + $0x60] sm:$0xf]
      %v280 = vld [vmem:[%s236 + $0x64] sm:$0xf]
      %v281 = vld [vmem:[%s236 + $0x68] sm:$0xf]
      %v282 = vld [vmem:[%s236 + $0x6c] sm:$0xf]
      %v283 = vld [vmem:[%s236 + $0x70] sm:$0xf]
      %v284 = vld [vmem:[%s236 + $0x74] sm:$0xf]
      %v285 = vld [vmem:[%s236 + $0x78] sm:$0xf]
      %v286 = vld [vmem:[%s236 + $0x7c] sm:$0xf]
      %v287 = vld [vmem:[%s1] sm:$0xf]
      %v288 = vld [vmem:[%s1 + $0x4] sm:$0xf]
      %v289 = vld [vmem:[%s1 + $0x8] sm:$0xf]
      %v290 = vld [vmem:[%s1 + $0xc] sm:$0xf]
      %v291 = vld [vmem:[%s1 + $0x10] sm:$0xf]
      %v292 = vld [vmem:[%s1 + $0x14] sm:$0xf]
      %v293 = vld [vmem:[%s1 + $0x18] sm:$0xf]
      %v294 = vld [vmem:[%s1 + $0x1c] sm:$0xf]
      %v295 = vld [vmem:[%s1 + $0x20] sm:$0xf]
      %v296 = vld [vmem:[%s1 + $0x24] sm:$0xf]
      %v297 = vld [vmem:[%s1 + $0x28] sm:$0xf]
      %v298 = vld [vmem:[%s1 + $0x2c] sm:$0xf]
      %v299 = vld [vmem:[%s1 + $0x30] sm:$0xf]
      %v300 = vld [vmem:[%s1 + $0x34] sm:$0xf]
      %v301 = vld [vmem:[%s1 + $0x38] sm:$0xf]
      %v302 = vld [vmem:[%s1 + $0x3c] sm:$0xf]
      %v335 = vunpack.c.l.b16 %v255
      %v336 = vunpack.c.l.b16 %v256
      %v337 = vunpack.c.l.b16 %v257
      %v338 = vunpack.c.l.b16 %v258
      %v339 = vunpack.c.l.b16 %v259
      %v340 = vunpack.c.l.b16 %v260
      %v341 = vunpack.c.l.b16 %v261
      %v342 = vunpack.c.l.b16 %v262
      %v343 = vunpack.c.l.b16 %v263
      %v344 = vunpack.c.l.b16 %v264
      %v345 = vunpack.c.l.b16 %v265
      %v346 = vunpack.c.l.b16 %v266
      %v347 = vunpack.c.l.b16 %v267
      %v348 = vunpack.c.l.b16 %v268
      %v349 = vunpack.c.l.b16 %v269
      %v350 = vunpack.c.l.b16 %v270
      %v351 = vunpack.c.l.b16 %v271
      %v352 = vunpack.c.l.b16 %v272
      %v353 = vunpack.c.l.b16 %v273
      %v354 = vunpack.c.l.b16 %v274
      %v355 = vunpack.c.l.b16 %v275
      %v356 = vunpack.c.l.b16 %v276
      %v357 = vunpack.c.l.b16 %v277
      %v358 = vunpack.c.l.b16 %v278
      %v359 = vunpack.c.l.b16 %v279
      %v360 = vunpack.c.l.b16 %v280
      %v361 = vunpack.c.l.b16 %v281
      %v362 = vunpack.c.l.b16 %v282
      %v363 = vunpack.c.l.b16 %v283
      %v364 = vunpack.c.l.b16 %v284
      %v365 = vunpack.c.l.b16 %v285
      %v366 = vunpack.c.l.b16 %v286
      %v367 = vpack.c.b16 %v336, %v335
      %v368 = vpack.c.b16 %v338, %v337
      %v369 = vpack.c.b16 %v340, %v339
      %v370 = vpack.c.b16 %v342, %v341
      %v371 = vpack.c.b16 %v344, %v343
      %v372 = vpack.c.b16 %v346, %v345
      %v373 = vpack.c.b16 %v348, %v347
      %v374 = vpack.c.b16 %v350, %v349
      %v375 = vpack.c.b16 %v352, %v351
      %v376 = vpack.c.b16 %v354, %v353
      %v377 = vpack.c.b16 %v356, %v355
      %v378 = vpack.c.b16 %v358, %v357
      %v379 = vpack.c.b16 %v360, %v359
      %v380 = vpack.c.b16 %v362, %v361
      %v381 = vpack.c.b16 %v364, %v363
      %v382 = vpack.c.b16 %v366, %v365
      %v415 = vunpack.c.l.b16 %v287
      %v416 = vunpack.c.l.b16 %v288
      %v417 = vunpack.c.l.b16 %v289
      %v418 = vunpack.c.l.b16 %v290
      %v419 = vunpack.c.l.b16 %v291
      %v420 = vunpack.c.l.b16 %v292
      %v421 = vunpack.c.l.b16 %v293
      %v422 = vunpack.c.l.b16 %v294
      %v423 = vunpack.c.l.b16 %v295
      %v424 = vunpack.c.l.b16 %v296
      %v425 = vunpack.c.l.b16 %v297
      %v426 = vunpack.c.l.b16 %v298
      %v427 = vunpack.c.l.b16 %v299
      %v428 = vunpack.c.l.b16 %v300
      %v429 = vunpack.c.l.b16 %v301
      %v430 = vunpack.c.l.b16 %v302
      %v431 = vpack.c.b16 %v416, %v415
      %v432 = vpack.c.b16 %v418, %v417
      %v433 = vpack.c.b16 %v420, %v419
      %v434 = vpack.c.b16 %v422, %v421
      %v435 = vpack.c.b16 %v424, %v423
      %v436 = vpack.c.b16 %v426, %v425
      %v437 = vpack.c.b16 %v428, %v427
      %v438 = vpack.c.b16 %v430, %v429
      %447 = vmatprep.subr.bf16.mxu0 0
      %448 = vmatpush1.bf16.msra.mxu0 %v431
      %449 = vmatprep.subr.bf16.mxu0 0
      %450 = vmatpush1.bf16.msra.mxu0 %v432
      %451 = vmatprep.subr.bf16.mxu0 0
      %452 = vmatpush1.bf16.msra.mxu0 %v433
      %453 = vmatprep.subr.bf16.mxu0 0
      %454 = vmatpush1.bf16.msra.mxu0 %v434
      %455 = vmatprep.subr.bf16.mxu0 0
      %456 = vmatpush1.bf16.msra.mxu0 %v435
      %457 = vmatprep.subr.bf16.mxu0 0
      %458 = vmatpush1.bf16.msra.mxu0 %v436
      %459 = vmatprep.subr.bf16.mxu0 0
      %460 = vmatpush1.bf16.msra.mxu0 %v437
      %461 = vmatprep.subr.bf16.mxu0 0
      %462 = vmatpush1.bf16.msra.mxu0 %v438
      %463 = vmatprep.subr.bf16.mxu0 0
      %464 = vmatpush1.bf16.msra.mxu0 0
      %465 = vmatprep.subr.bf16.mxu0 0
      %466 = vmatpush1.bf16.msra.mxu0 0
      %467 = vmatprep.subr.bf16.mxu0 0
      %468 = vmatpush1.bf16.msra.mxu0 0
      %469 = vmatprep.subr.bf16.mxu0 0
      %470 = vmatpush1.bf16.msra.mxu0 0
      %471 = vmatprep.subr.bf16.mxu0 0
      %472 = vmatpush1.bf16.msra.mxu0 0
      %473 = vmatprep.subr.bf16.mxu0 0
      %474 = vmatpush1.bf16.msra.mxu0 0
      %475 = vmatprep.subr.bf16.mxu0 0
      %476 = vmatpush1.bf16.msra.mxu0 0
      %477 = vmatprep.subr.bf16.mxu0 0
      %478 = vmatpush1.bf16.msra.mxu0 0
      %479 = vmatprep.mubr.bf16.mxu0 0
      %480 = vmatmul.mubr.bf16.gmra.mrb[0].mxu0 %v367
      %v481 = vpop.f32.mrb[0].mxu0
      %v482 = vadd.f32 0.0, %v481
      %v483 = vpop.f32.mrb[0].mxu0
      %v484 = vpop.f32.mrb[0].mxu0
      %v485 = vadd.f32 0.0, %v484
      %v486 = vpop.f32.mrb[0].mxu0
      %487 = vmatprep.mubr.bf16.mxu0 0
      %488 = vmatmul.mubr.bf16.gmra.mrb[0].mxu0 %v368
      %v489 = vpop.f32.mrb[0].mxu0
      %v490 = vadd.f32 0.0, %v489
      %v491 = vpop.f32.mrb[0].mxu0
      %v492 = vpop.f32.mrb[0].mxu0
      %v493 = vadd.f32 0.0, %v492
      %v494 = vpop.f32.mrb[0].mxu0
      %495 = vmatprep.mubr.bf16.mxu0 0
      %496 = vmatmul.mubr.bf16.gmra.mrb[0].mxu0 %v369
      %v497 = vpop.f32.mrb[0].mxu0
      %v498 = vadd.f32 0.0, %v497
      %v499 = vpop.f32.mrb[0].mxu0
      %v500 = vpop.f32.mrb[0].mxu0
      %v501 = vadd.f32 0.0, %v500
      %v502 = vpop.f32.mrb[0].mxu0
      %503 = vmatprep.mubr.bf16.mxu0 0
      %504 = vmatmul.mubr.bf16.gmra.mrb[0].mxu0 %v370
      %v505 = vpop.f32.mrb[0].mxu0
      %v506 = vadd.f32 0.0, %v505
      %v507 = vpop.f32.mrb[0].mxu0
      %v508 = vpop.f32.mrb[0].mxu0
      %v509 = vadd.f32 0.0, %v508
      %v510 = vpop.f32.mrb[0].mxu0
      %511 = vmatprep.mubr.bf16.mxu0 0
      %512 = vmatmul.mubr.bf16.gmra.mrb[0].mxu0 %v371
      %v513 = vpop.f32.mrb[0].mxu0
      %v514 = vadd.f32 0.0, %v513
      %v515 = vpop.f32.mrb[0].mxu0
      %v516 = vpop.f32.mrb[0].mxu0
      %v517 = vadd.f32 0.0, %v516
      %v518 = vpop.f32.mrb[0].mxu0
      %519 = vmatprep.mubr.bf16.mxu0 0
      %520 = vmatmul.mubr.bf16.gmra.mrb[0].mxu0 %v372
      %v521 = vpop.f32.mrb[0].mxu0
      %v522 = vadd.f32 0.0, %v521
      %v523 = vpop.f32.mrb[0].mxu0
      %v524 = vpop.f32.mrb[0].mxu0
      %v525 = vadd.f32 0.0, %v524
      %v526 = vpop.f32.mrb[0].mxu0
      %527 = vmatprep.mubr.bf16.mxu0 0
      %528 = vmatmul.mubr.bf16.gmra.mrb[0].mxu0 %v373
      %v529 = vpop.f32.mrb[0].mxu0
      %v530 = vadd.f32 0.0, %v529
      %v531 = vpop.f32.mrb[0].mxu0
      %v532 = vpop.f32.mrb[0].mxu0
      %v533 = vadd.f32 0.0, %v532
      %v534 = vpop.f32.mrb[0].mxu0
      %535 = vmatprep.mubr.bf16.mxu0 0
      %536 = vmatmul.mubr.bf16.gmra.mrb[0].mxu0 %v374
      %v537 = vpop.f32.mrb[0].mxu0
      %v538 = vadd.f32 0.0, %v537
      %v539 = vpop.f32.mrb[0].mxu0
      %v540 = vpop.f32.mrb[0].mxu0
      %v541 = vadd.f32 0.0, %v540
      %v542 = vpop.f32.mrb[0].mxu0
      %543 = vmatprep.mubr.bf16.mxu0 0
      %544 = vmatmul.mubr.bf16.gmra.mrb[0].mxu0 %v375
      %v545 = vpop.f32.mrb[0].mxu0
      %v546 = vadd.f32 0.0, %v545
      %v547 = vpop.f32.mrb[0].mxu0
      %v548 = vpop.f32.mrb[0].mxu0
      %v549 = vadd.f32 0.0, %v548
      %v550 = vpop.f32.mrb[0].mxu0
      %551 = vmatprep.mubr.bf16.mxu0 0
      %552 = vmatmul.mubr.bf16.gmra.mrb[0].mxu0 %v376
      %v553 = vpop.f32.mrb[0].mxu0
      %v554 = vadd.f32 0.0, %v553
      %v555 = vpop.f32.mrb[0].mxu0
      %v556 = vpop.f32.mrb[0].mxu0
      %v557 = vadd.f32 0.0, %v556
      %v558 = vpop.f32.mrb[0].mxu0
      %559 = vmatprep.mubr.bf16.mxu0 0
      %560 = vmatmul.mubr.bf16.gmra.mrb[0].mxu0 %v377
      %v561 = vpop.f32.mrb[0].mxu0
      %v562 = vadd.f32 0.0, %v561
      %v563 = vpop.f32.mrb[0].mxu0
      %v564 = vpop.f32.mrb[0].mxu0
      %v565 = vadd.f32 0.0, %v564
      %v566 = vpop.f32.mrb[0].mxu0
      %567 = vmatprep.mubr.bf16.mxu0 0
      %568 = vmatmul.mubr.bf16.gmra.mrb[0].mxu0 %v378
      %v569 = vpop.f32.mrb[0].mxu0
      %v570 = vadd.f32 0.0, %v569
      %v571 = vpop.f32.mrb[0].mxu0
      %v572 = vpop.f32.mrb[0].mxu0
      %v573 = vadd.f32 0.0, %v572
      %v574 = vpop.f32.mrb[0].mxu0
      %575 = vmatprep.mubr.bf16.mxu0 0
      %576 = vmatmul.mubr.bf16.gmra.mrb[0].mxu0 %v379
      %v577 = vpop.f32.mrb[0].mxu0
      %v578 = vadd.f32 0.0, %v577
      %v579 = vpop.f32.mrb[0].mxu0
      %v580 = vpop.f32.mrb[0].mxu0
      %v581 = vadd.f32 0.0, %v580
      %v582 = vpop.f32.mrb[0].mxu0
      %583 = vmatprep.mubr.bf16.mxu0 0
      %584 = vmatmul.mubr.bf16.gmra.mrb[0].mxu0 %v380
      %v585 = vpop.f32.mrb[0].mxu0
      %v586 = vadd.f32 0.0, %v585
      %v587 = vpop.f32.mrb[0].mxu0
      %v588 = vpop.f32.mrb[0].mxu0
      %v589 = vadd.f32 0.0, %v588
      %v590 = vpop.f32.mrb[0].mxu0
      %591 = vmatprep.mubr.bf16.mxu0 0
      %592 = vmatmul.mubr.bf16.gmra.mrb[0].mxu0 %v381
      %v593 = vpop.f32.mrb[0].mxu0
      %v594 = vadd.f32 0.0, %v593
      %v595 = vpop.f32.mrb[0].mxu0
      %v596 = vpop.f32.mrb[0].mxu0
      %v597 = vadd.f32 0.0, %v596
      %v598 = vpop.f32.mrb[0].mxu0
      %599 = vmatprep.mubr.bf16.mxu0 0
      %600 = vmatmul.mubr.bf16.gmra.mrb[0].mxu0 %v382
      %v601 = vpop.f32.mrb[0].mxu0
      %v602 = vadd.f32 0.0, %v601
      %v603 = vpop.f32.mrb[0].mxu0
      %v604 = vpop.f32.mrb[0].mxu0
      %v605 = vadd.f32 0.0, %v604
      %v606 = vpop.f32.mrb[0].mxu0
      %607 = vdwg.mxu0
      %v608 = vpack.c.bf16 %v485, %v482
      %v609 = vpack.c.bf16 %v493, %v490
      %v610 = vpack.c.bf16 %v501, %v498
      %v611 = vpack.c.bf16 %v509, %v506
      %v612 = vpack.c.bf16 %v517, %v514
      %v613 = vpack.c.bf16 %v525, %v522
      %v614 = vpack.c.bf16 %v533, %v530
      %v615 = vpack.c.bf16 %v541, %v538
      %v616 = vpack.c.bf16 %v549, %v546
      %v617 = vpack.c.bf16 %v557, %v554
      %v618 = vpack.c.bf16 %v565, %v562
      %v619 = vpack.c.bf16 %v573, %v570
      %v620 = vpack.c.bf16 %v581, %v578
      %v621 = vpack.c.bf16 %v589, %v586
      %v622 = vpack.c.bf16 %v597, %v594
      %v623 = vpack.c.bf16 %v605, %v602
      %v640 = vunpack.c.l.b16 %v608
      %v641 = vunpack.c.h.b16 %v608
      %v642 = vunpack.c.l.b16 %v609
      %v643 = vunpack.c.h.b16 %v609
      %v644 = vunpack.c.l.b16 %v610
      %v645 = vunpack.c.h.b16 %v610
      %v646 = vunpack.c.l.b16 %v611
      %v647 = vunpack.c.h.b16 %v611
      %v648 = vunpack.c.l.b16 %v612
      %v649 = vunpack.c.h.b16 %v612
      %v650 = vunpack.c.l.b16 %v613
      %v651 = vunpack.c.h.b16 %v613
      %v652 = vunpack.c.l.b16 %v614
      %v653 = vunpack.c.h.b16 %v614
      %v654 = vunpack.c.l.b16 %v615
      %v655 = vunpack.c.h.b16 %v615
      %v656 = vunpack.c.l.b16 %v616
      %v657 = vunpack.c.h.b16 %v616
      %v658 = vunpack.c.l.b16 %v617
      %v659 = vunpack.c.h.b16 %v617
      %v660 = vunpack.c.l.b16 %v618
      %v661 = vunpack.c.h.b16 %v618
      %v662 = vunpack.c.l.b16 %v619
      %v663 = vunpack.c.h.b16 %v619
      %v664 = vunpack.c.l.b16 %v620
      %v665 = vunpack.c.h.b16 %v620
      %v666 = vunpack.c.l.b16 %v621
      %v667 = vunpack.c.h.b16 %v621
      %v668 = vunpack.c.l.b16 %v622
      %v669 = vunpack.c.h.b16 %v622
      %v670 = vunpack.c.l.b16 %v623
      %v671 = vunpack.c.h.b16 %v623
      %v672 = vpack.c.b16 %v640, %v640
      %v673 = vpack.c.b16 %v641, %v641
      %v674 = vpack.c.b16 %v642, %v642
      %v675 = vpack.c.b16 %v643, %v643
      %v676 = vpack.c.b16 %v644, %v644
      %v677 = vpack.c.b16 %v645, %v645
      %v678 = vpack.c.b16 %v646, %v646
      %v679 = vpack.c.b16 %v647, %v647
      %v680 = vpack.c.b16 %v648, %v648
      %v681 = vpack.c.b16 %v649, %v649
      %v682 = vpack.c.b16 %v650, %v650
      %v683 = vpack.c.b16 %v651, %v651
      %v684 = vpack.c.b16 %v652, %v652
      %v685 = vpack.c.b16 %v653, %v653
      %v686 = vpack.c.b16 %v654, %v654
      %v687 = vpack.c.b16 %v655, %v655
      %v688 = vpack.c.b16 %v656, %v656
      %v689 = vpack.c.b16 %v657, %v657
      %v690 = vpack.c.b16 %v658, %v658
      %v691 = vpack.c.b16 %v659, %v659
      %v692 = vpack.c.b16 %v660, %v660
      %v693 = vpack.c.b16 %v661, %v661
      %v694 = vpack.c.b16 %v662, %v662
      %v695 = vpack.c.b16 %v663, %v663
      %v696 = vpack.c.b16 %v664, %v664
      %v697 = vpack.c.b16 %v665, %v665
      %v698 = vpack.c.b16 %v666, %v666
      %v699 = vpack.c.b16 %v667, %v667
      %v700 = vpack.c.b16 %v668, %v668
      %v701 = vpack.c.b16 %v669, %v669
      %v702 = vpack.c.b16 %v670, %v670
      %v703 = vpack.c.b16 %v671, %v671
      %736 = vst [vmem:[%s246] sm:$0xf] %v672
      %737 = vst [vmem:[%s246 + $0x4] sm:$0xf] %v673
      %738 = vst [vmem:[%s246 + $0x8] sm:$0xf] %v674
      %739 = vst [vmem:[%s246 + $0xc] sm:$0xf] %v675
      %740 = vst [vmem:[%s246 + $0x10] sm:$0xf] %v676
      %741 = vst [vmem:[%s246 + $0x14] sm:$0xf] %v677
      %742 = vst [vmem:[%s246 + $0x18] sm:$0xf] %v678
      %743 = vst [vmem:[%s246 + $0x1c] sm:$0xf] %v679
      %744 = vst [vmem:[%s246 + $0x20] sm:$0xf] %v680
      %745 = vst [vmem:[%s246 + $0x24] sm:$0xf] %v681
      %746 = vst [vmem:[%s246 + $0x28] sm:$0xf] %v682
      %747 = vst [vmem:[%s246 + $0x2c] sm:$0xf] %v683
      %748 = vst [vmem:[%s246 + $0x30] sm:$0xf] %v684
      %749 = vst [vmem:[%s246 + $0x34] sm:$0xf] %v685
      %750 = vst [vmem:[%s246 + $0x38] sm:$0xf] %v686
      %751 = vst [vmem:[%s246 + $0x3c] sm:$0xf] %v687
      %752 = vst [vmem:[%s246 + $0x40] sm:$0xf] %v688
      %753 = vst [vmem:[%s246 + $0x44] sm:$0xf] %v689
      %754 = vst [vmem:[%s246 + $0x48] sm:$0xf] %v690
      %755 = vst [vmem:[%s246 + $0x4c] sm:$0xf] %v691
      %756 = vst [vmem:[%s246 + $0x50] sm:$0xf] %v692
      %757 = vst [vmem:[%s246 + $0x54] sm:$0xf] %v693
      %758 = vst [vmem:[%s246 + $0x58] sm:$0xf] %v694
      %759 = vst [vmem:[%s246 + $0x5c] sm:$0xf] %v695
      %760 = vst [vmem:[%s246 + $0x60] sm:$0xf] %v696
      %761 = vst [vmem:[%s246 + $0x64] sm:$0xf] %v697
      %762 = vst [vmem:[%s246 + $0x68] sm:$0xf] %v698
      %763 = vst [vmem:[%s246 + $0x6c] sm:$0xf] %v699
      %764 = vst [vmem:[%s246 + $0x70] sm:$0xf] %v700
      %765 = vst [vmem:[%s246 + $0x74] sm:$0xf] %v701
      %766 = vst [vmem:[%s246 + $0x78] sm:$0xf] %v702
      %767 = vst [vmem:[%s246 + $0x7c] sm:$0xf] %v703
      %v768 = vadd.f32 %v482, %v485
      %v769 = vadd.f32 %v768, %v490
      %v770 = vadd.f32 %v769, %v493
      %v771 = vadd.f32 %v770, %v498
      %v772 = vadd.f32 %v771, %v501
      %v773 = vadd.f32 %v772, %v506
      %v774 = vadd.f32 %v773, %v509
      %v775 = vadd.f32 %v774, %v514
      %v776 = vadd.f32 %v775, %v517
      %v777 = vadd.f32 %v776, %v522
      %v778 = vadd.f32 %v777, %v525
      %v779 = vadd.f32 %v778, %v530
      %v780 = vadd.f32 %v779, %v533
      %v781 = vadd.f32 %v780, %v538
      %v782 = vadd.f32 %v781, %v541
      %v783 = vadd.f32 %v782, %v546
      %v784 = vadd.f32 %v783, %v549
      %v785 = vadd.f32 %v784, %v554
      %v786 = vadd.f32 %v785, %v557
      %v787 = vadd.f32 %v786, %v562
      %v788 = vadd.f32 %v787, %v565
      %v789 = vadd.f32 %v788, %v570
      %v790 = vadd.f32 %v789, %v573
      %v791 = vadd.f32 %v790, %v578
      %v792 = vadd.f32 %v791, %v581
      %v793 = vadd.f32 %v792, %v586
      %v794 = vadd.f32 %v793, %v589
      %v795 = vadd.f32 %v794, %v594
      %v796 = vadd.f32 %v795, %v597
      %v797 = vadd.f32 %v796, %v602
      %v798 = vadd.f32 %v797, %v605
      %v799 = vrot.slane %v798, 4
      %v800 = vadd.f32 %v798, %v799
      %v801 = vrot.slane %v800, 2
      %v802 = vadd.f32 %v800, %v801
      %v803 = vrot.slane %v802, 1
      %v804 = vadd.f32 %v802, %v803
      %v805 = vmul.f32 %v482, %v482
      %v806 = vmul.f32 %v485, %v485
      %v807 = vmul.f32 %v490, %v490
      %v808 = vmul.f32 %v493, %v493
      %v809 = vmul.f32 %v498, %v498
      %v810 = vmul.f32 %v501, %v501
      %v811 = vmul.f32 %v506, %v506
      %v812 = vmul.f32 %v509, %v509
      %v813 = vmul.f32 %v514, %v514
      %v814 = vmul.f32 %v517, %v517
      %v815 = vmul.f32 %v522, %v522
      %v816 = vmul.f32 %v525, %v525
      %v817 = vmul.f32 %v530, %v530
      %v818 = vmul.f32 %v533, %v533
      %v819 = vmul.f32 %v538, %v538
      %v820 = vmul.f32 %v541, %v541
      %v821 = vmul.f32 %v546, %v546
      %v822 = vmul.f32 %v549, %v549
      %v823 = vmul.f32 %v554, %v554
      %v824 = vmul.f32 %v557, %v557
      %v825 = vmul.f32 %v562, %v562
      %v826 = vmul.f32 %v565, %v565
      %v827 = vmul.f32 %v570, %v570
      %v828 = vmul.f32 %v573, %v573
      %v829 = vmul.f32 %v578, %v578
      %v830 = vmul.f32 %v581, %v581
      %v831 = vmul.f32 %v586, %v586
      %v832 = vmul.f32 %v589, %v589
      %v833 = vmul.f32 %v594, %v594
      %v834 = vmul.f32 %v597, %v597
      %v835 = vmul.f32 %v602, %v602
      %v836 = vmul.f32 %v605, %v605
      %v837 = vadd.f32 %v805, %v806
      %v838 = vadd.f32 %v837, %v807
      %v839 = vadd.f32 %v838, %v808
      %v840 = vadd.f32 %v839, %v809
      %v841 = vadd.f32 %v840, %v810
      %v842 = vadd.f32 %v841, %v811
      %v843 = vadd.f32 %v842, %v812
      %v844 = vadd.f32 %v843, %v813
      %v845 = vadd.f32 %v844, %v814
      %v846 = vadd.f32 %v845, %v815
      %v847 = vadd.f32 %v846, %v816
      %v848 = vadd.f32 %v847, %v817
      %v849 = vadd.f32 %v848, %v818
      %v850 = vadd.f32 %v849, %v819
      %v851 = vadd.f32 %v850, %v820
      %v852 = vadd.f32 %v851, %v821
      %v853 = vadd.f32 %v852, %v822
      %v854 = vadd.f32 %v853, %v823
      %v855 = vadd.f32 %v854, %v824
      %v856 = vadd.f32 %v855, %v825
      %v857 = vadd.f32 %v856, %v826
      %v858 = vadd.f32 %v857, %v827
      %v859 = vadd.f32 %v858, %v828
      %v860 = vadd.f32 %v859, %v829
      %v861 = vadd.f32 %v860, %v830
      %v862 = vadd.f32 %v861, %v831
      %v863 = vadd.f32 %v862, %v832
      %v864 = vadd.f32 %v863, %v833
      %v865 = vadd.f32 %v864, %v834
      %v866 = vadd.f32 %v865, %v835
      %v867 = vadd.f32 %v866, %v836
      %v868 = vrot.slane %v867, 4
      %v869 = vadd.f32 %v867, %v868
      %v870 = vrot.slane %v869, 2
      %v871 = vadd.f32 %v869, %v870
      %v872 = vrot.slane %v871, 1
      %v873 = vadd.f32 %v871, %v872
      %p874 = scmp.eq.s32.totalorder %s21, 0
      // Predicated region
      $region29: #{unet_block_forward.4} parent=27 // pred_check
        %p875 = pneg %p874
      $region30: #{unet_block_forward.4} parent=27 // pred_check_branch
        %877 = sbr.rel (%p875) target = $region32
      $region31: #{unet_block_forward.4} parent=27 // pred_region
        %878 = vst [vmem:[%s250] sm:$0x1] %v804
        %879 = vst [vmem:[%s253] sm:$0x1] %v873
      $region32: #{unet_block_forward.4} parent=27 // pred_fallthru
        _
      %p880 = scmp.ne.s32.totalorder %s21, 0
      // Predicated region
      $region33: #{unet_block_forward.4} parent=27 // pred_check
        %p881 = pneg %p880
      $region34: #{unet_block_forward.4} parent=27 // pred_check_branch
        %883 = sbr.rel (%p881) target = $region36
      $region35: #{unet_block_forward.4} parent=27 // pred_region
        %v884 = vld [vmem:[%s250] sm:$0x1]
        %v885 = vadd.f32 %v884, %v804
        %886 = vst [vmem:[%s250] sm:$0x1] %v885
        %v887 = vld [vmem:[%s253] sm:$0x1]
        %v888 = vadd.f32 %v887, %v873
        %889 = vst [vmem:[%s253] sm:$0x1] %v888
      $region36: #{unet_block_forward.4} parent=27 // pred_fallthru
        _
      %s890 = smul.u32 32, %s21
      %p891 = scmp.lt.s32.totalorder %s20, 1
      %s892 = scalar_select %p891, %s20, 1
      %p893 = scmp.lt.s32.totalorder %s890, 511
      %s894 = scalar_select %p893, %s890, 511
      %s895 = smul.addr %s892, 512
      %s896 = sadd.s32 %s894, %s895
      %s897 = smul.addr %s896, 4
      %s898 = scalar_lea.vmem %s2, %s897
      %p899 = scmp.lt.s32.totalorder %s20, 1
      %s900 = scalar_select %p899, %s20, 1
      %s901 = scalar_lea.vmem %s3, %s900
      %p902 = scmp.lt.s32.totalorder %s20, 1
      %s903 = scalar_select %p902, %s20, 1
      %s904 = scalar_lea.vmem %s4, %s903
      // Predicated region
      $region37: #{unet_block_forward.4} parent=27 // pred_check
        %p905 = pneg %p97
      $region38: #{unet_block_forward.4} parent=27 // pred_check_branch
        %907 = sbr.rel (%p905) target = $region40
      $region39: #{unet_block_forward.4} parent=27 // pred_region
        %s908 = smul.u32 32, %s21
      $region40: #{unet_block_forward.4} parent=27 // pred_fallthru
        _
      // Predicated region
      $region41: #{unet_block_forward.4} parent=27 // pred_check
        %p909 = pneg %p123
      $region42: #{unet_block_forward.4} parent=27 // pred_check_branch
        %911 = sbr.rel (%p909) target = $region44
      $region43: #{unet_block_forward.4} parent=27 // pred_region
        _
      $region44: #{unet_block_forward.4} parent=27 // pred_fallthru
        _
      // Predicated region
      $region45: #{unet_block_forward.4} parent=27 // pred_check
        %p912 = pneg %p149
      $region46: #{unet_block_forward.4} parent=27 // pred_check_branch
        %914 = sbr.rel (%p912) target = $region48
      $region47: #{unet_block_forward.4} parent=27 // pred_region
        _
      $region48: #{unet_block_forward.4} parent=27 // pred_fallthru
        _
    $region28: #{unet_block_forward.4} parent=5 // pred_fallthru
      _
    %p915 = scmp.le.s32.totalorder 2, %s11
    // Predicated region
    $region49: #{unet_block_forward.4} parent=5 // pred_check
      %p916 = pneg %p915
    $region50: #{unet_block_forward.4} parent=5 // pred_check_branch
      %918 = sbr.rel (%p916) target = $region52
    $region51: #{unet_block_forward.4} parent=5 // pred_region
      %s919 = ssub.s32 %s11, 2
      // Predicated region
      $region53: #{unet_block_forward.4} parent=51 // pred_check
        %p920 = pneg %p103
      $region54: #{unet_block_forward.4} parent=51 // pred_check_branch
        %922 = sbr.rel (%p920) target = $region56
      $region55: #{unet_block_forward.4} parent=51 // pred_region
        %s923 = smul.u32 32, %s23
        %p924 = scmp.lt.s32.totalorder %s22, 1
        %s925 = scalar_select %p924, %s22, 1
        %p926 = scmp.lt.s32.totalorder %s923, 511
        %s927 = scalar_select %p926, %s923, 511
        %s928 = smul.addr %s925, 512
        %s929 = sadd.s32 %s927, %s928
        %s930 = smul.addr %s929, 4
        %s931 = scalar_lea.vmem %s2, %s930
      $region56: #{unet_block_forward.4} parent=51 // pred_fallthru
        _
      // Predicated region
      $region57: #{unet_block_forward.4} parent=51 // pred_check
        %p932 = pneg %p129
      $region58: #{unet_block_forward.4} parent=51 // pred_check_branch
        %934 = sbr.rel (%p932) target = $region60
      $region59: #{unet_block_forward.4} parent=51 // pred_region
        %p935 = scmp.lt.s32.totalorder %s22, 1
        %s936 = scalar_select %p935, %s22, 1
        %s937 = scalar_lea.vmem %s3, %s936
      $region60: #{unet_block_forward.4} parent=51 // pred_fallthru
        _
      // Predicated region
      $region61: #{unet_block_forward.4} parent=51 // pred_check
        %p938 = pneg %p155
      $region62: #{unet_block_forward.4} parent=51 // pred_check_branch
        %940 = sbr.rel (%p938) target = $region64
      $region63: #{unet_block_forward.4} parent=51 // pred_region
        %p941 = scmp.lt.s32.totalorder %s22, 1
        %s942 = scalar_select %p941, %s22, 1
        %s943 = scalar_lea.vmem %s4, %s942
      $region64: #{unet_block_forward.4} parent=51 // pred_fallthru
        _
    $region52: #{unet_block_forward.4} parent=5 // pred_fallthru
      _
  $region6: #{unet_block_forward.4} parent=0 // loop_footer
    %s15 = sadd.s32 1, %s11
  $region7: #{unet_block_forward.4} parent=0 // loop_footer_branch
    %10 = sbr.rel target = $region3
  $region8: #{unet_block_forward.4} parent=0 // loop_exit
    _

</llo_original>
